<compile_context>
chip_gen: v5e
topology: v5e:2x2
jax: 0.10.0
libtpu: 0.0.40
codegen_flags: <defaults>
</compile_context>

<pallas_src>
import functools
import math

import jax
import jax.numpy as jnp
from jax.experimental import pallas as pl
from jax.experimental.pallas import tpu as pltpu

COMPUTE_DTYPE = jnp.bfloat16          # MXU operand dtype (accumulation stays f32)


@functools.lru_cache(maxsize=None)
def _vmem_limit_bytes():
    """Generation-dependent scoped-VMEM limit (~0.75x physical capacity)."""
    try:
        cap = getattr(pltpu.get_tpu_info(), "vmem_capacity_bytes", None)
        if cap:
            return int(cap) * 3 // 4
    except Exception:
        pass
    return 48 * 1024 * 1024            # conservative fallback (safe on v7x's 64 MiB)


def _mosaic_params(dimension_semantics):
    return pltpu.CompilerParams(dimension_semantics=dimension_semantics,
                                vmem_limit_bytes=_vmem_limit_bytes())


# ----------------------------------------------------------------------------
# Small Pallas kernels: patch-embed matmul and LayerNorm
# ----------------------------------------------------------------------------
def _matmul_kernel(a_ref, b_ref, o_ref):
    o_ref[...] = jnp.dot(a_ref[...], b_ref[...],
                         preferred_element_type=jnp.float32).astype(o_ref.dtype)


def pallas_matmul(a, b, *, block_m=512):
    """(M, K) @ (K, N) -> (M, N) f32, row-tiled so large M pipelines over HBM."""
    M, K = a.shape
    K2, N = b.shape
    assert K == K2
    bm = M if M <= block_m else block_m
    return pl.pallas_call(
        _matmul_kernel,
        out_shape=jax.ShapeDtypeStruct((M, N), jnp.float32),
        grid=(pl.cdiv(M, bm),),
        in_specs=[pl.BlockSpec((bm, K), lambda i: (i, 0)),
                  pl.BlockSpec((K, N), lambda i: (0, 0))],
        out_specs=pl.BlockSpec((bm, N), lambda i: (i, 0)),
        compiler_params=_mosaic_params(("parallel",)),
    )(a, b)


def _ln_kernel(x_ref, w_ref, b_ref, o_ref):
    # PyTorch LayerNorm semantics: biased variance, eps=1e-5, computed in fp32.
    x = x_ref[...].astype(jnp.float32)
    mu = jnp.mean(x, axis=-1, keepdims=True)
    var = jnp.mean((x - mu) ** 2, axis=-1, keepdims=True)
    y = (x - mu) * jax.lax.rsqrt(var + 1e-5)
    o_ref[...] = (y * w_ref[...] + b_ref[...]).astype(o_ref.dtype)


def pallas_layernorm(x2d, w, b, *, block_m=512):
    """LayerNorm over last dim of a 2-D array (N, D), row-tiled."""
    N, D = x2d.shape
    bm = N if N <= block_m else block_m
    return pl.pallas_call(
        _ln_kernel,
        out_shape=jax.ShapeDtypeStruct((N, D), x2d.dtype),
        grid=(pl.cdiv(N, bm),),
        in_specs=[pl.BlockSpec((bm, D), lambda i: (i, 0)),
                  pl.BlockSpec((1, D), lambda i: (0, 0)),
                  pl.BlockSpec((1, D), lambda i: (0, 0))],
        out_specs=pl.BlockSpec((bm, D), lambda i: (i, 0)),
        compiler_params=_mosaic_params(("parallel",)),
    )(x2d, w.reshape(1, D), b.reshape(1, D))


def _ln_f32(v, w, b):
    mu = jnp.mean(v, axis=-1, keepdims=True)
    var = jnp.mean((v - mu) ** 2, axis=-1, keepdims=True)
    return (v - mu) * jax.lax.rsqrt(var + 1e-5) * w + b


# ----------------------------------------------------------------------------
# Fused transformer kernel: whole layer stack in one pallas_call
# ----------------------------------------------------------------------------
def _transformer_kernel(x_ref,
                        ln1_w, ln1_b, in_wt, in_b, out_wt, out_b,
                        ln2_w, ln2_b, fc_wt, fc_b, pj_wt, pj_b,
                        o_ref, qkv_scr, ctx_scr, *, heads):
    """Grid = (batch, layers).  The residual stream is the resident output block
    across the layer axis; weights are the current layer's slices."""
    layer = pl.program_id(1)

    @pl.when(layer == 0)
    def _():
        o_ref[...] = x_ref[...]                     # initialize residual stream

    x = o_ref[0].astype(jnp.float32)                # (L, D) f32 residual stream
    L, D = x.shape
    hd = D // heads
    cdt = in_wt.dtype                               # bf16 MXU operand dtype

    # --- x = x + attn(ln_1(x)) ---
    h1 = _ln_f32(x, ln1_w[0], ln1_b[0])
    # QKV projection; 1/sqrt(hd) already folded into the Q weights/bias.
    # Cast to bf16 once and stage in VMEM scratch (halves live footprint, no
    # per-head per-slice casts).
    qkv_scr[...] = (jnp.dot(h1.astype(cdt), in_wt[0],
                            preferred_element_type=jnp.float32)
                    + in_b[0]).astype(cdt)          # (L, 3D) bf16

    # Q @ K^T via dot_general contracting on the last dims (no .T / XLU vxpose).
    qk_dims = (((1,), (1,)), ((), ()))
    # TODO(synk): for heads >= 12 switch to lax.fori_loop + pl.ds column slices,
    # and pair heads (hd=64 -> 128-wide) for lane-dense ctx_scr stores.
    for h in range(heads):
        q = qkv_scr[:, h * hd:(h + 1) * hd]                       # (L, hd) bf16
        k = qkv_scr[:, D + h * hd:D + (h + 1) * hd]
        v = qkv_scr[:, 2 * D + h * hd:2 * D + (h + 1) * hd]
        s = jax.lax.dot_general(q, k, dimension_numbers=qk_dims,
                                preferred_element_type=jnp.float32)  # (L, L) f32
        s = s - jnp.max(s, axis=-1, keepdims=True)                   # stable softmax
        p = jnp.exp(s)
        p = p * pl.reciprocal(jnp.sum(p, axis=-1, keepdims=True), approx=True)
        ctx_scr[:, h * hd:(h + 1) * hd] = jnp.dot(
            p.astype(cdt), v, preferred_element_type=jnp.float32).astype(cdt)

    attn = jnp.dot(ctx_scr[...], out_wt[0],
                   preferred_element_type=jnp.float32) + out_b[0]    # (L, D) f32
    x = x + attn

    # --- x = x + mlp(ln_2(x)) ---
    h2 = _ln_f32(x, ln2_w[0], ln2_b[0])
    m = jnp.dot(h2.astype(cdt), fc_wt[0],
                preferred_element_type=jnp.float32) + fc_b[0]        # (L, 4D) f32
    m = m * jax.nn.sigmoid(1.702 * m)                                # QuickGELU (f32)
    m = jnp.dot(m.astype(cdt), pj_wt[0],
                preferred_element_type=jnp.float32) + pj_b[0]        # (L, D) f32
    x = x + m

    o_ref[0] = x.astype(o_ref.dtype)


_STACKED_KEYS = ('ln1_w', 'ln1_b', 'in_wt', 'in_b', 'out_wt', 'out_b',
                 'ln2_w', 'ln2_b', 'fc_wt', 'fc_b', 'pj_wt', 'pj_b')


def pallas_transformer(x, stacked, heads):
    """x: (B, L, D) f32.  stacked: dict of (layers, ...) kernel-ready weights."""
    B, L, D = x.shape
    layers = stacked['in_wt'].shape[0]
    params = [stacked[k] for k in _STACKED_KEYS]        # all 3-D: (layers, r, c)

    def wspec(p):
        return pl.BlockSpec((1,) + p.shape[1:], lambda b, l: (l, 0, 0))

    kernel = functools.partial(_transformer_kernel, heads=heads)
    # NOTE: x is donated (aliased to the output); do not reuse the pre-transformer
    # activation after this call.
    return pl.pallas_call(
        kernel,
        out_shape=jax.ShapeDtypeStruct((B, L, D), x.dtype),
        grid=(B, layers),
        in_specs=[pl.BlockSpec((1, L, D), lambda b, l: (b, 0, 0))]
                 + [wspec(p) for p in params],
        out_specs=pl.BlockSpec((1, L, D), lambda b, l: (b, 0, 0)),
        scratch_shapes=[pltpu.VMEM((L, 3 * D), COMPUTE_DTYPE),   # staged QKV (bf16)
                        pltpu.VMEM((L, D), COMPUTE_DTYPE)],      # per-head contexts (bf16)
        input_output_aliases={0: 0},
        compiler_params=_mosaic_params(("parallel", "arbitrary")),
    )(x, *params)


# ----------------------------------------------------------------------------
# Parameter construction (deterministic, synthetic) and kernel-ready prep
# ----------------------------------------------------------------------------
def init_vit_params(key, *, input_resolution, patch_size, width, layers, heads, output_dim):
    """Synthetic parameters in PyTorch layouts (all float32)."""
    D = width
    L = (input_resolution // patch_size) ** 2 + 1
    scale = D ** (-0.5)
    keys = jax.random.split(key, 4 + layers)

    params = {
        'conv_w': 0.02 * jax.random.normal(keys[0], (D, 3, patch_size, patch_size), jnp.float32),
        'class_embedding': scale * jax.random.normal(keys[1], (D,), jnp.float32),
        'positional_embedding': scale * jax.random.normal(keys[2], (L, D), jnp.float32),
        'ln_pre_w': jnp.ones((D,), jnp.float32), 'ln_pre_b': jnp.zeros((D,), jnp.float32),
        'ln_post_w': jnp.ones((D,), jnp.float32), 'ln_post_b': jnp.zeros((D,), jnp.float32),
        'proj': scale * jax.random.normal(keys[3], (D, output_dim), jnp.float32),  # unused here
        'blocks': [],
    }
    for i in range(layers):
        ks = jax.random.split(keys[4 + i], 8)
        params['blocks'].append({
            'ln1_w': jnp.ones((D,), jnp.float32), 'ln1_b': jnp.zeros((D,), jnp.float32),
            'in_w': 0.02 * jax.random.normal(ks[0], (3 * D, D), jnp.float32),   # PyTorch (3D, D)
            'in_b': 0.01 * jax.random.normal(ks[4], (3 * D,), jnp.float32),
            'out_w': 0.02 * jax.random.normal(ks[1], (D, D), jnp.float32),
            'out_b': 0.01 * jax.random.normal(ks[5], (D,), jnp.float32),
            'ln2_w': jnp.ones((D,), jnp.float32), 'ln2_b': jnp.zeros((D,), jnp.float32),
            'fc_w': 0.02 * jax.random.normal(ks[2], (4 * D, D), jnp.float32),
            'fc_b': 0.01 * jax.random.normal(ks[6], (4 * D,), jnp.float32),
            'pj_w': 0.02 * jax.random.normal(ks[3], (D, 4 * D), jnp.float32),
            'pj_b': 0.01 * jax.random.normal(ks[7], (D,), jnp.float32),
        })
    return params


def prepare_params(params, *, heads):
    """Kernel-ready layouts: per-layer weights stacked along a leading `layers`
    axis, matmul weights pre-transposed + bf16, LN/bias terms f32, and the
    attention 1/sqrt(head_dim) scale folded into the Q projection rows."""
    D = params['class_embedding'].shape[0]
    assert D % heads == 0
    hd = D // heads
    scale = 1.0 / math.sqrt(hd)
    q_scale = jnp.concatenate([jnp.full((D,), scale, jnp.float32),
                               jnp.ones((2 * D,), jnp.float32)])

    per_layer = {k: [] for k in _STACKED_KEYS}
    for blk in params['blocks']:
        in_w = blk['in_w'] * q_scale[:, None]                 # fold scale into Q rows
        in_b = blk['in_b'] * q_scale
        per_layer['ln1_w'].append(blk['ln1_w'].reshape(1, D))
        per_layer['ln1_b'].append(blk['ln1_b'].reshape(1, D))
        per_layer['in_wt'].append(in_w.T.astype(COMPUTE_DTYPE))        # (D, 3D)
        per_layer['in_b'].append(in_b.reshape(1, 3 * D))
        per_layer['out_wt'].append(blk['out_w'].T.astype(COMPUTE_DTYPE))  # (D, D)
        per_layer['out_b'].append(blk['out_b'].reshape(1, D))
        per_layer['ln2_w'].append(blk['ln2_w'].reshape(1, D))
        per_layer['ln2_b'].append(blk['ln2_b'].reshape(1, D))
        per_layer['fc_wt'].append(blk['fc_w'].T.astype(COMPUTE_DTYPE))    # (D, 4D)
        per_layer['fc_b'].append(blk['fc_b'].reshape(1, 4 * D))
        per_layer['pj_wt'].append(blk['pj_w'].T.astype(COMPUTE_DTYPE))    # (4D, D)
        per_layer['pj_b'].append(blk['pj_b'].reshape(1, D))

    stacked = {k: jnp.stack(v, axis=0) for k, v in per_layer.items()}
    return {
        'conv_wt': params['conv_w'].reshape(D, -1).T.astype(COMPUTE_DTYPE),  # (C*p*p, D)
        'class_embedding': params['class_embedding'],
        'positional_embedding': params['positional_embedding'],
        'ln_pre_w': params['ln_pre_w'], 'ln_pre_b': params['ln_pre_b'],
        'ln_post_w': params['ln_post_w'], 'ln_post_b': params['ln_post_b'],
        'stacked': stacked,
    }


# ----------------------------------------------------------------------------
# Forward pass (box_coords=None path)
# ----------------------------------------------------------------------------
@functools.partial(jax.jit, static_argnames=("patch_size", "heads"))
def vision_transformer_forward(x_nchw, params, *, patch_size, heads):
    B, C, H, W = x_nchw.shape
    p = patch_size
    gh, gw = H // p, W // p
    D = params['conv_wt'].shape[1]

    # conv1 (stride == kernel_size, no bias) == non-overlapping patch matmul.
    patches = (x_nchw.reshape(B, C, gh, p, gw, p)
               .transpose(0, 2, 4, 1, 3, 5)               # (B, gh, gw, C, p, p)
               .reshape(B * gh * gw, C * p * p)
               .astype(COMPUTE_DTYPE))
    emb = pallas_matmul(patches, params['conv_wt']).reshape(B, gh * gw, D)   # f32

    # prepend class token, add positional embedding.
    cls = jnp.broadcast_to(params['class_embedding'][None, None, :], (B, 1, D))
    x = jnp.concatenate([cls.astype(emb.dtype), emb], axis=1)                # (B, L, D)
    x = x + params['positional_embedding'][None, :, :]
    L = x.shape[1]

    # ln_pre
    x = pallas_layernorm(x.reshape(B * L, D),
                         params['ln_pre_w'], params['ln_pre_b']).reshape(B, L, D)

    # transformer: all layers fused into one pallas_call (resident residual stream).
    x = pallas_transformer(x, params['stacked'], heads)

    # ln_post applied to the class token only; image tokens returned raw.
    cls_tok = pallas_layernorm(x[:, 0, :], params['ln_post_w'], params['ln_post_b'])
    img_tok = x[:, 1:, :]
    return cls_tok, img_tok


# ----------------------------------------------------------------------------
# Main
# ----------------------------------------------------------------------------
if __name__ == "__main__":
    # NOTE: demo shapes; tune/benchmark at production shapes (D>=768, L=197/257,
    # hd=64) before drawing tiling conclusions.
    input_resolution = 16
    patch_size = 4
    width = 32
    layers = 2
    heads = 4
    output_dim = 16
    batch = 2

    key = jax.random.PRNGKey(0)
    k_img, k_param = jax.random.split(key)

    raw_params = init_vit_params(k_param,
                                 input_resolution=input_resolution,
                                 patch_size=patch_size,
                                 width=width,
                                 layers=layers,
                                 heads=heads,
                                 output_dim=output_dim)
    params = prepare_params(raw_params, heads=heads)

    x = jax.random.normal(k_img, (batch, 3, input_resolution, input_resolution), jnp.float32)

    cls_tok, img_tok = vision_transformer_forward(x, params,
                                                  patch_size=patch_size, heads=heads)
    jax.block_until_ready((cls_tok, img_tok))

    assert cls_tok.shape == (batch, width)
    assert img_tok.shape == (batch, (input_resolution // patch_size) ** 2, width)
    print("KERNEL_OK")
</pallas_src>

<mosaic_0001>
module attributes {stable_mosaic.version = 11 : i64} {
  func.func @_matmul_kernel(%arg0: i32, %arg1: memref<32x48xbf16, #tpu.memory_space<vmem>>, %arg2: memref<48x32xbf16, #tpu.memory_space<vmem>>, %arg3: memref<32x32xf32, #tpu.memory_space<vmem>>) attributes {dimension_semantics = [#tpu.dimension_semantics<parallel>], iteration_bounds = array<i64: 1>, scalar_prefetch = 0 : i64, scratch_operands = 0 : i64, tpu.core_type = #tpu.core_type<tc>, window_params = [{transform_indices = @transform_0, window_bounds = array<i64: 32, 48>}, {pipeline_mode = #tpu.pipeline_mode<synchronous>, transform_indices = @transform_1, window_bounds = array<i64: 48, 32>}, {transform_indices = @transform_2, window_bounds = array<i64: 32, 32>}]} {
    %c0 = arith.constant 0 : index
    %c0_0 = arith.constant 0 : index
    %0 = vector.load %arg1[%c0, %c0_0] : memref<32x48xbf16, #tpu.memory_space<vmem>>, vector<32x48xbf16>
    %c0_1 = arith.constant 0 : index
    %c0_2 = arith.constant 0 : index
    %1 = vector.load %arg2[%c0_1, %c0_2] : memref<48x32xbf16, #tpu.memory_space<vmem>>, vector<48x32xbf16>
    %cst = arith.constant dense<0.000000e+00> : vector<32x32xf32>
    %2 = tpu.matmul %0, %1, %cst {dimension_numbers = #tpu.dot_dimension_numbers<[1], [0], [0], [1], [0, 0, 1, 1], [], []>} : vector<32x48xbf16>, vector<48x32xbf16>, vector<32x32xf32> -> vector<32x32xf32>
    %c0_3 = arith.constant 0 : index
    %c0_4 = arith.constant 0 : index
    %3 = vector.load %arg3[%c0_3, %c0_4] : memref<32x32xf32, #tpu.memory_space<vmem>>, vector<32x32xf32>
    tpu.vector_store %arg3[%c0_3, %c0_4], %2 {strides = array<i32>} : memref<32x32xf32, #tpu.memory_space<vmem>>, vector<32x32xf32>,
    return
  }
  func.func @transform_0(%arg0: i32) -> (i32, i32) {
    %c0_i32 = arith.constant 0 : i32
    %c0_i32_0 = arith.constant 0 : i32
    return %arg0, %c0_i32 : i32, i32
  }
  func.func @transform_1(%arg0: i32) -> (i32, i32) {
    %c0_i32 = arith.constant 0 : i32
    %c0_i32_0 = arith.constant 0 : i32
    %c0_i32_1 = arith.constant 0 : i32
    return %c0_i32, %c0_i32_0 : i32, i32
  }
  func.func @transform_2(%arg0: i32) -> (i32, i32) {
    %c0_i32 = arith.constant 0 : i32
    %c0_i32_0 = arith.constant 0 : i32
    return %arg0, %c0_i32 : i32, i32
  }
}

module attributes {stable_mosaic.version = 11 : i64} {
  func.func @_ln_kernel(%arg0: i32, %arg1: memref<34x32xf32, #tpu.memory_space<vmem>>, %arg2: memref<1x32xf32, #tpu.memory_space<vmem>>, %arg3: memref<1x32xf32, #tpu.memory_space<vmem>>, %arg4: memref<34x32xf32, #tpu.memory_space<vmem>>) attributes {dimension_semantics = [#tpu.dimension_semantics<parallel>], iteration_bounds = array<i64: 1>, scalar_prefetch = 0 : i64, scratch_operands = 0 : i64, tpu.core_type = #tpu.core_type<tc>, window_params = [{transform_indices = @transform_0, window_bounds = array<i64: 34, 32>}, {pipeline_mode = #tpu.pipeline_mode<synchronous>, transform_indices = @transform_1, window_bounds = array<i64: 1, 32>}, {pipeline_mode = #tpu.pipeline_mode<synchronous>, transform_indices = @transform_2, window_bounds = array<i64: 1, 32>}, {transform_indices = @transform_3, window_bounds = array<i64: 34, 32>}]} {
    %c0 = arith.constant 0 : index
    %c0_0 = arith.constant 0 : index
    %0 = vector.load %arg1[%c0, %c0_0] : memref<34x32xf32, #tpu.memory_space<vmem>>, vector<34x32xf32>
    %cst = arith.constant dense<0.000000e+00> : vector<34xf32>
    %1 = vector.multi_reduction <add>, %0, %cst [1] : vector<34x32xf32> to vector<34xf32>
    %2 = vector.shape_cast %1 : vector<34xf32> to vector<34x1xf32>
    %cst_1 = arith.constant 3.200000e+01 : f32
    %3 = vector.broadcast %cst_1 : f32 to vector<34x1xf32>
    %4 = arith.divf %2, %3 : vector<34x1xf32>
    %5 = vector.broadcast %4 : vector<34x1xf32> to vector<34x32xf32>
    %6 = arith.subf %0, %5 : vector<34x32xf32>
    %7 = arith.mulf %6, %6 : vector<34x32xf32>
    %cst_2 = arith.constant dense<0.000000e+00> : vector<34xf32>
    %8 = vector.multi_reduction <add>, %7, %cst_2 [1] : vector<34x32xf32> to vector<34xf32>
    %9 = vector.shape_cast %8 : vector<34xf32> to vector<34x1xf32>
    %cst_3 = arith.constant 3.200000e+01 : f32
    %10 = vector.broadcast %cst_3 : f32 to vector<34x1xf32>
    %11 = arith.divf %9, %10 : vector<34x1xf32>
    %12 = vector.broadcast %4 : vector<34x1xf32> to vector<34x32xf32>
    %13 = arith.subf %0, %12 : vector<34x32xf32>
    %cst_4 = arith.constant 9.99999974E-6 : f32
    %14 = vector.broadcast %cst_4 : f32 to vector<34x1xf32>
    %15 = arith.addf %11, %14 : vector<34x1xf32>
    %16 = math.rsqrt %15 : vector<34x1xf32>
    %17 = vector.broadcast %16 : vector<34x1xf32> to vector<34x32xf32>
    %18 = arith.mulf %13, %17 : vector<34x32xf32>
    %c0_5 = arith.constant 0 : index
    %c0_6 = arith.constant 0 : index
    %19 = vector.load %arg2[%c0_5, %c0_6] : memref<1x32xf32, #tpu.memory_space<vmem>>, vector<1x32xf32>
    %20 = vector.broadcast %19 : vector<1x32xf32> to vector<34x32xf32>
    %21 = arith.mulf %18, %20 : vector<34x32xf32>
    %c0_7 = arith.constant 0 : index
    %c0_8 = arith.constant 0 : index
    %22 = vector.load %arg3[%c0_7, %c0_8] : memref<1x32xf32, #tpu.memory_space<vmem>>, vector<1x32xf32>
    %23 = vector.broadcast %22 : vector<1x32xf32> to vector<34x32xf32>
    %24 = arith.addf %21, %23 : vector<34x32xf32>
    %c0_9 = arith.constant 0 : index
    %c0_10 = arith.constant 0 : index
    %25 = vector.load %arg4[%c0_9, %c0_10] : memref<34x32xf32, #tpu.memory_space<vmem>>, vector<34x32xf32>
    tpu.vector_store %arg4[%c0_9, %c0_10], %24 {strides = array<i32>} : memref<34x32xf32, #tpu.memory_space<vmem>>, vector<34x32xf32>,
    return
  }
  func.func @transform_0(%arg0: i32) -> (i32, i32) {
    %c0_i32 = arith.constant 0 : i32
    %c0_i32_0 = arith.constant 0 : i32
    return %arg0, %c0_i32 : i32, i32
  }
  func.func @transform_1(%arg0: i32) -> (i32, i32) {
    %c0_i32 = arith.constant 0 : i32
    %c0_i32_0 = arith.constant 0 : i32
    %c0_i32_1 = arith.constant 0 : i32
    return %c0_i32, %c0_i32_0 : i32, i32
  }
  func.func @transform_2(%arg0: i32) -> (i32, i32) {
    %c0_i32 = arith.constant 0 : i32
    %c0_i32_0 = arith.constant 0 : i32
    %c0_i32_1 = arith.constant 0 : i32
    return %c0_i32, %c0_i32_0 : i32, i32
  }
  func.func @transform_3(%arg0: i32) -> (i32, i32) {
    %c0_i32 = arith.constant 0 : i32
    %c0_i32_0 = arith.constant 0 : i32
    return %arg0, %c0_i32 : i32, i32
  }
}

module attributes {stable_mosaic.version = 11 : i64} {
  func.func @_transformer_kernel(%arg0: i32, %arg1: i32, %arg2: memref<1x17x32xf32, #tpu.memory_space<vmem>>, %arg3: memref<1x1x32xf32, #tpu.memory_space<vmem>>, %arg4: memref<1x1x32xf32, #tpu.memory_space<vmem>>, %arg5: memref<1x32x96xbf16, #tpu.memory_space<vmem>>, %arg6: memref<1x1x96xf32, #tpu.memory_space<vmem>>, %arg7: memref<1x32x32xbf16, #tpu.memory_space<vmem>>, %arg8: memref<1x1x32xf32, #tpu.memory_space<vmem>>, %arg9: memref<1x1x32xf32, #tpu.memory_space<vmem>>, %arg10: memref<1x1x32xf32, #tpu.memory_space<vmem>>, %arg11: memref<1x32x128xbf16, #tpu.memory_space<vmem>>, %arg12: memref<1x1x128xf32, #tpu.memory_space<vmem>>, %arg13: memref<1x128x32xbf16, #tpu.memory_space<vmem>>, %arg14: memref<1x1x32xf32, #tpu.memory_space<vmem>>, %arg15: memref<1x17x32xf32, #tpu.memory_space<vmem>>, %arg16: memref<17x96xbf16, #tpu.memory_space<vmem>>, %arg17: memref<17x32xbf16, #tpu.memory_space<vmem>>) attributes {dimension_semantics = [#tpu.dimension_semantics<parallel>, #tpu.dimension_semantics<arbitrary>], iteration_bounds = array<i64: 2, 2>, scalar_prefetch = 0 : i64, scratch_operands = 2 : i64, tpu.core_type = #tpu.core_type<tc>, window_params = [{transform_indices = @transform_0, window_bounds = array<i64: 1, 17, 32>}, {transform_indices = @transform_1, window_bounds = array<i64: 1, 1, 32>}, {transform_indices = @transform_2, window_bounds = array<i64: 1, 1, 32>}, {transform_indices = @transform_3, window_bounds = array<i64: 1, 32, 96>}, {transform_indices = @transform_4, window_bounds = array<i64: 1, 1, 96>}, {transform_indices = @transform_5, window_bounds = array<i64: 1, 32, 32>}, {transform_indices = @transform_6, window_bounds = array<i64: 1, 1, 32>}, {transform_indices = @transform_7, window_bounds = array<i64: 1, 1, 32>}, {transform_indices = @transform_8, window_bounds = array<i64: 1, 1, 32>}, {transform_indices = @transform_9, window_bounds = array<i64: 1, 32, 128>}, {transform_indices = @transform_10, window_bounds = array<i64: 1, 1, 128>}, {transform_indices = @transform_11, window_bounds = array<i64: 1, 128, 32>}, {transform_indices = @transform_12, window_bounds = array<i64: 1, 1, 32>}, {transform_indices = @transform_13, window_bounds = array<i64: 1, 17, 32>}]} {
    %c0_i32 = arith.constant 0 : i32
    %0 = arith.cmpi eq, %arg1, %c0_i32 : i32
    %1 = arith.extui %0 : i1 to i32
    %c0_i32_0 = arith.constant 0 : i32
    %2 = arith.cmpi ne, %1, %c0_i32_0 : i32
    scf.if %2 {
      %c0_98 = arith.constant 0 : index
      %c0_99 = arith.constant 0 : index
      %c0_100 = arith.constant 0 : index
      %176 = vector.load %arg2[%c0_98, %c0_99, %c0_100] : memref<1x17x32xf32, #tpu.memory_space<vmem>>, vector<1x17x32xf32>
      %c0_101 = arith.constant 0 : index
      %c0_102 = arith.constant 0 : index
      %c0_103 = arith.constant 0 : index
      %177 = vector.load %arg15[%c0_101, %c0_102, %c0_103] : memref<1x17x32xf32, #tpu.memory_space<vmem>>, vector<1x17x32xf32>
      tpu.vector_store %arg15[%c0_101, %c0_102, %c0_103], %176 {strides = array<i32>} : memref<1x17x32xf32, #tpu.memory_space<vmem>>, vector<1x17x32xf32>,
    } else {
    }
    %c0 = arith.constant 0 : index
    %c0_1 = arith.constant 0 : index
    %c0_2 = arith.constant 0 : index
    %3 = vector.load %arg15[%c0, %c0_1, %c0_2] : memref<1x17x32xf32, #tpu.memory_space<vmem>>, vector<1x17x32xf32>
    %4 = vector.shape_cast %3 : vector<1x17x32xf32> to vector<17x32xf32>
    %c0_3 = arith.constant 0 : index
    %c0_4 = arith.constant 0 : index
    %c0_5 = arith.constant 0 : index
    %5 = vector.load %arg3[%c0_3, %c0_4, %c0_5] : memref<1x1x32xf32, #tpu.memory_space<vmem>>, vector<1x1x32xf32>
    %6 = vector.shape_cast %5 : vector<1x1x32xf32> to vector<1x32xf32>
    %c0_6 = arith.constant 0 : index
    %c0_7 = arith.constant 0 : index
    %c0_8 = arith.constant 0 : index
    %7 = vector.load %arg4[%c0_6, %c0_7, %c0_8] : memref<1x1x32xf32, #tpu.memory_space<vmem>>, vector<1x1x32xf32>
    %8 = vector.shape_cast %7 : vector<1x1x32xf32> to vector<1x32xf32>
    %cst = arith.constant dense<0.000000e+00> : vector<17xf32>
    %9 = vector.multi_reduction <add>, %4, %cst [1] : vector<17x32xf32> to vector<17xf32>
    %10 = vector.shape_cast %9 : vector<17xf32> to vector<17x1xf32>
    %cst_9 = arith.constant 3.200000e+01 : f32
    %11 = vector.broadcast %cst_9 : f32 to vector<17x1xf32>
    %12 = arith.divf %10, %11 : vector<17x1xf32>
    %13 = vector.broadcast %12 : vector<17x1xf32> to vector<17x32xf32>
    %14 = arith.subf %4, %13 : vector<17x32xf32>
    %15 = arith.mulf %14, %14 : vector<17x32xf32>
    %cst_10 = arith.constant dense<0.000000e+00> : vector<17xf32>
    %16 = vector.multi_reduction <add>, %15, %cst_10 [1] : vector<17x32xf32> to vector<17xf32>
    %17 = vector.shape_cast %16 : vector<17xf32> to vector<17x1xf32>
    %cst_11 = arith.constant 3.200000e+01 : f32
    %18 = vector.broadcast %cst_11 : f32 to vector<17x1xf32>
    %19 = arith.divf %17, %18 : vector<17x1xf32>
    %20 = vector.broadcast %12 : vector<17x1xf32> to vector<17x32xf32>
    %21 = arith.subf %4, %20 : vector<17x32xf32>
    %cst_12 = arith.constant 9.99999974E-6 : f32
    %22 = vector.broadcast %cst_12 : f32 to vector<17x1xf32>
    %23 = arith.addf %19, %22 : vector<17x1xf32>
    %24 = math.rsqrt %23 : vector<17x1xf32>
    %25 = vector.broadcast %24 : vector<17x1xf32> to vector<17x32xf32>
    %26 = arith.mulf %21, %25 : vector<17x32xf32>
    %27 = vector.broadcast %6 : vector<1x32xf32> to vector<17x32xf32>
    %28 = arith.mulf %26, %27 : vector<17x32xf32>
    %29 = vector.broadcast %8 : vector<1x32xf32> to vector<17x32xf32>
    %30 = arith.addf %28, %29 : vector<17x32xf32>
    %31 = arith.truncf %30 : vector<17x32xf32> to vector<17x32xbf16>
    %c0_13 = arith.constant 0 : index
    %c0_14 = arith.constant 0 : index
    %c0_15 = arith.constant 0 : index
    %32 = vector.load %arg5[%c0_13, %c0_14, %c0_15] : memref<1x32x96xbf16, #tpu.memory_space<vmem>>, vector<1x32x96xbf16>
    %33 = vector.shape_cast %32 : vector<1x32x96xbf16> to vector<32x96xbf16>
    %cst_16 = arith.constant dense<0.000000e+00> : vector<17x96xf32>
    %34 = tpu.matmul %31, %33, %cst_16 {dimension_numbers = #tpu.dot_dimension_numbers<[1], [0], [0], [1], [0, 0, 1, 1], [], []>} : vector<17x32xbf16>, vector<32x96xbf16>, vector<17x96xf32> -> vector<17x96xf32>
    %c0_17 = arith.constant 0 : index
    %c0_18 = arith.constant 0 : index
    %c0_19 = arith.constant 0 : index
    %35 = vector.load %arg6[%c0_17, %c0_18, %c0_19] : memref<1x1x96xf32, #tpu.memory_space<vmem>>, vector<1x1x96xf32>
    %36 = vector.shape_cast %35 : vector<1x1x96xf32> to vector<1x96xf32>
    %37 = vector.broadcast %36 : vector<1x96xf32> to vector<17x96xf32>
    %38 = arith.addf %34, %37 : vector<17x96xf32>
    %39 = arith.truncf %38 : vector<17x96xf32> to vector<17x96xbf16>
    %c0_20 = arith.constant 0 : index
    %c0_21 = arith.constant 0 : index
    %40 = vector.load %arg16[%c0_20, %c0_21] : memref<17x96xbf16, #tpu.memory_space<vmem>>, vector<17x96xbf16>
    tpu.vector_store %arg16[%c0_20, %c0_21], %39 {strides = array<i32>} : memref<17x96xbf16, #tpu.memory_space<vmem>>, vector<17x96xbf16>,
    %c0_22 = arith.constant 0 : index
    %c0_23 = arith.constant 0 : index
    %41 = vector.load %arg16[%c0_22, %c0_23] : memref<17x96xbf16, #tpu.memory_space<vmem>>, vector<17x8xbf16>
    %c0_24 = arith.constant 0 : index
    %c32 = arith.constant 32 : index
    %42 = vector.load %arg16[%c0_24, %c32] : memref<17x96xbf16, #tpu.memory_space<vmem>>, vector<17x8xbf16>
    %c0_25 = arith.constant 0 : index
    %c64 = arith.constant 64 : index
    %43 = vector.load %arg16[%c0_25, %c64] : memref<17x96xbf16, #tpu.memory_space<vmem>>, vector<17x8xbf16>
    %cst_26 = arith.constant dense<0.000000e+00> : vector<17x17xf32>
    %44 = tpu.matmul %41, %42, %cst_26 {dimension_numbers = #tpu.dot_dimension_numbers<[1], [1], [0], [0], [0, 0, 1, 0], [], []>} : vector<17x8xbf16>, vector<17x8xbf16>, vector<17x17xf32> -> vector<17x17xf32>
    %cst_27 = arith.constant dense<0xFF800000> : vector<17xf32>
    %45 = vector.multi_reduction <maximumf>, %44, %cst_27 [1] : vector<17x17xf32> to vector<17xf32>
    %46 = vector.shape_cast %45 : vector<17xf32> to vector<17x1xf32>
    %47 = vector.broadcast %46 : vector<17x1xf32> to vector<17x17xf32>
    %48 = arith.subf %44, %47 : vector<17x17xf32>
    %49 = math.exp %48 : vector<17x17xf32>
    %cst_28 = arith.constant dense<0.000000e+00> : vector<17xf32>
    %50 = vector.multi_reduction <add>, %49, %cst_28 [1] : vector<17x17xf32> to vector<17xf32>
    %51 = vector.shape_cast %50 : vector<17xf32> to vector<17x1xf32>
    %52 = tpu.reciprocal %51 {approx = true} : vector<17x1xf32> -> vector<17x1xf32>
    %53 = vector.broadcast %52 : vector<17x1xf32> to vector<17x17xf32>
    %54 = arith.mulf %49, %53 : vector<17x17xf32>
    %55 = arith.truncf %54 : vector<17x17xf32> to vector<17x17xbf16>
    %cst_29 = arith.constant dense<0.000000e+00> : vector<17x8xf32>
    %56 = tpu.matmul %55, %43, %cst_29 {dimension_numbers = #tpu.dot_dimension_numbers<[1], [0], [0], [1], [0, 0, 1, 1], [], []>} : vector<17x17xbf16>, vector<17x8xbf16>, vector<17x8xf32> -> vector<17x8xf32>
    %57 = arith.truncf %56 : vector<17x8xf32> to vector<17x8xbf16>
    %c0_30 = arith.constant 0 : index
    %c0_31 = arith.constant 0 : index
    %58 = vector.load %arg17[%c0_30, %c0_31] : memref<17x32xbf16, #tpu.memory_space<vmem>>, vector<17x8xbf16>
    tpu.vector_store %arg17[%c0_30, %c0_31], %57 {strides = array<i32>} : memref<17x32xbf16, #tpu.memory_space<vmem>>, vector<17x8xbf16>,
    %c0_32 = arith.constant 0 : index
    %c8 = arith.constant 8 : index
    %59 = vector.load %arg16[%c0_32, %c8] : memref<17x96xbf16, #tpu.memory_space<vmem>>, vector<17x8xbf16>
    %c0_33 = arith.constant 0 : index
    %c40 = arith.constant 40 : index
    %60 = vector.load %arg16[%c0_33, %c40] : memref<17x96xbf16, #tpu.memory_space<vmem>>, vector<17x8xbf16>
    %c0_34 = arith.constant 0 : index
    %c72 = arith.constant 72 : index
    %61 = vector.load %arg16[%c0_34, %c72] : memref<17x96xbf16, #tpu.memory_space<vmem>>, vector<17x8xbf16>
    %cst_35 = arith.constant dense<0.000000e+00> : vector<17x17xf32>
    %62 = tpu.matmul %59, %60, %cst_35 {dimension_numbers = #tpu.dot_dimension_numbers<[1], [1], [0], [0], [0, 0, 1, 0], [], []>} : vector<17x8xbf16>, vector<17x8xbf16>, vector<17x17xf32> -> vector<17x17xf32>
    %cst_36 = arith.constant dense<0xFF800000> : vector<17xf32>
    %63 = vector.multi_reduction <maximumf>, %62, %cst_36 [1] : vector<17x17xf32> to vector<17xf32>
    %64 = vector.shape_cast %63 : vector<17xf32> to vector<17x1xf32>
    %65 = vector.broadcast %64 : vector<17x1xf32> to vector<17x17xf32>
    %66 = arith.subf %62, %65 : vector<17x17xf32>
    %67 = math.exp %66 : vector<17x17xf32>
    %cst_37 = arith.constant dense<0.000000e+00> : vector<17xf32>
    %68 = vector.multi_reduction <add>, %67, %cst_37 [1] : vector<17x17xf32> to vector<17xf32>
    %69 = vector.shape_cast %68 : vector<17xf32> to vector<17x1xf32>
    %70 = tpu.reciprocal %69 {approx = true} : vector<17x1xf32> -> vector<17x1xf32>
    %71 = vector.broadcast %70 : vector<17x1xf32> to vector<17x17xf32>
    %72 = arith.mulf %67, %71 : vector<17x17xf32>
    %73 = arith.truncf %72 : vector<17x17xf32> to vector<17x17xbf16>
    %cst_38 = arith.constant dense<0.000000e+00> : vector<17x8xf32>
    %74 = tpu.matmul %73, %61, %cst_38 {dimension_numbers = #tpu.dot_dimension_numbers<[1], [0], [0], [1], [0, 0, 1, 1], [], []>} : vector<17x17xbf16>, vector<17x8xbf16>, vector<17x8xf32> -> vector<17x8xf32>
    %75 = arith.truncf %74 : vector<17x8xf32> to vector<17x8xbf16>
    %c0_39 = arith.constant 0 : index
    %c8_40 = arith.constant 8 : index
    %76 = vector.load %arg17[%c0_39, %c8_40] : memref<17x32xbf16, #tpu.memory_space<vmem>>, vector<17x8xbf16>
    tpu.vector_store %arg17[%c0_39, %c8_40], %75 {strides = array<i32>} : memref<17x32xbf16, #tpu.memory_space<vmem>>, vector<17x8xbf16>,
    %c0_41 = arith.constant 0 : index
    %c16 = arith.constant 16 : index
    %77 = vector.load %arg16[%c0_41, %c16] : memref<17x96xbf16, #tpu.memory_space<vmem>>, vector<17x8xbf16>
    %c0_42 = arith.constant 0 : index
    %c48 = arith.constant 48 : index
    %78 = vector.load %arg16[%c0_42, %c48] : memref<17x96xbf16, #tpu.memory_space<vmem>>, vector<17x8xbf16>
    %c0_43 = arith.constant 0 : index
    %c80 = arith.constant 80 : index
    %79 = vector.load %arg16[%c0_43, %c80] : memref<17x96xbf16, #tpu.memory_space<vmem>>, vector<17x8xbf16>
    %cst_44 = arith.constant dense<0.000000e+00> : vector<17x17xf32>
    %80 = tpu.matmul %77, %78, %cst_44 {dimension_numbers = #tpu.dot_dimension_numbers<[1], [1], [0], [0], [0, 0, 1, 0], [], []>} : vector<17x8xbf16>, vector<17x8xbf16>, vector<17x17xf32> -> vector<17x17xf32>
    %cst_45 = arith.constant dense<0xFF800000> : vector<17xf32>
    %81 = vector.multi_reduction <maximumf>, %80, %cst_45 [1] : vector<17x17xf32> to vector<17xf32>
    %82 = vector.shape_cast %81 : vector<17xf32> to vector<17x1xf32>
    %83 = vector.broadcast %82 : vector<17x1xf32> to vector<17x17xf32>
    %84 = arith.subf %80, %83 : vector<17x17xf32>
    %85 = math.exp %84 : vector<17x17xf32>
    %cst_46 = arith.constant dense<0.000000e+00> : vector<17xf32>
    %86 = vector.multi_reduction <add>, %85, %cst_46 [1] : vector<17x17xf32> to vector<17xf32>
    %87 = vector.shape_cast %86 : vector<17xf32> to vector<17x1xf32>
    %88 = tpu.reciprocal %87 {approx = true} : vector<17x1xf32> -> vector<17x1xf32>
    %89 = vector.broadcast %88 : vector<17x1xf32> to vector<17x17xf32>
    %90 = arith.mulf %85, %89 : vector<17x17xf32>
    %91 = arith.truncf %90 : vector<17x17xf32> to vector<17x17xbf16>
    %cst_47 = arith.constant dense<0.000000e+00> : vector<17x8xf32>
    %92 = tpu.matmul %91, %79, %cst_47 {dimension_numbers = #tpu.dot_dimension_numbers<[1], [0], [0], [1], [0, 0, 1, 1], [], []>} : vector<17x17xbf16>, vector<17x8xbf16>, vector<17x8xf32> -> vector<17x8xf32>
    %93 = arith.truncf %92 : vector<17x8xf32> to vector<17x8xbf16>
    %c0_48 = arith.constant 0 : index
    %c16_49 = arith.constant 16 : index
    %94 = vector.load %arg17[%c0_48, %c16_49] : memref<17x32xbf16, #tpu.memory_space<vmem>>, vector<17x8xbf16>
    tpu.vector_store %arg17[%c0_48, %c16_49], %93 {strides = array<i32>} : memref<17x32xbf16, #tpu.memory_space<vmem>>, vector<17x8xbf16>,
    %c0_50 = arith.constant 0 : index
    %c24 = arith.constant 24 : index
    %95 = vector.load %arg16[%c0_50, %c24] : memref<17x96xbf16, #tpu.memory_space<vmem>>, vector<17x8xbf16>
    %c0_51 = arith.constant 0 : index
    %c56 = arith.constant 56 : index
    %96 = vector.load %arg16[%c0_51, %c56] : memref<17x96xbf16, #tpu.memory_space<vmem>>, vector<17x8xbf16>
    %c0_52 = arith.constant 0 : index
    %c88 = arith.constant 88 : index
    %97 = vector.load %arg16[%c0_52, %c88] : memref<17x96xbf16, #tpu.memory_space<vmem>>, vector<17x8xbf16>
    %cst_53 = arith.constant dense<0.000000e+00> : vector<17x17xf32>
    %98 = tpu.matmul %95, %96, %cst_53 {dimension_numbers = #tpu.dot_dimension_numbers<[1], [1], [0], [0], [0, 0, 1, 0], [], []>} : vector<17x8xbf16>, vector<17x8xbf16>, vector<17x17xf32> -> vector<17x17xf32>
    %cst_54 = arith.constant dense<0xFF800000> : vector<17xf32>
    %99 = vector.multi_reduction <maximumf>, %98, %cst_54 [1] : vector<17x17xf32> to vector<17xf32>
    %100 = vector.shape_cast %99 : vector<17xf32> to vector<17x1xf32>
    %101 = vector.broadcast %100 : vector<17x1xf32> to vector<17x17xf32>
    %102 = arith.subf %98, %101 : vector<17x17xf32>
    %103 = math.exp %102 : vector<17x17xf32>
    %cst_55 = arith.constant dense<0.000000e+00> : vector<17xf32>
    %104 = vector.multi_reduction <add>, %103, %cst_55 [1] : vector<17x17xf32> to vector<17xf32>
    %105 = vector.shape_cast %104 : vector<17xf32> to vector<17x1xf32>
    %106 = tpu.reciprocal %105 {approx = true} : vector<17x1xf32> -> vector<17x1xf32>
    %107 = vector.broadcast %106 : vector<17x1xf32> to vector<17x17xf32>
    %108 = arith.mulf %103, %107 : vector<17x17xf32>
    %109 = arith.truncf %108 : vector<17x17xf32> to vector<17x17xbf16>
    %cst_56 = arith.constant dense<0.000000e+00> : vector<17x8xf32>
    %110 = tpu.matmul %109, %97, %cst_56 {dimension_numbers = #tpu.dot_dimension_numbers<[1], [0], [0], [1], [0, 0, 1, 1], [], []>} : vector<17x17xbf16>, vector<17x8xbf16>, vector<17x8xf32> -> vector<17x8xf32>
    %111 = arith.truncf %110 : vector<17x8xf32> to vector<17x8xbf16>
    %c0_57 = arith.constant 0 : index
    %c24_58 = arith.constant 24 : index
    %112 = vector.load %arg17[%c0_57, %c24_58] : memref<17x32xbf16, #tpu.memory_space<vmem>>, vector<17x8xbf16>
    tpu.vector_store %arg17[%c0_57, %c24_58], %111 {strides = array<i32>} : memref<17x32xbf16, #tpu.memory_space<vmem>>, vector<17x8xbf16>,
    %c0_59 = arith.constant 0 : index
    %c0_60 = arith.constant 0 : index
    %113 = vector.load %arg17[%c0_59, %c0_60] : memref<17x32xbf16, #tpu.memory_space<vmem>>, vector<17x32xbf16>
    %c0_61 = arith.constant 0 : index
    %c0_62 = arith.constant 0 : index
    %c0_63 = arith.constant 0 : index
    %114 = vector.load %arg7[%c0_61, %c0_62, %c0_63] : memref<1x32x32xbf16, #tpu.memory_space<vmem>>, vector<1x32x32xbf16>
    %115 = vector.shape_cast %114 : vector<1x32x32xbf16> to vector<32x32xbf16>
    %cst_64 = arith.constant dense<0.000000e+00> : vector<17x32xf32>
    %116 = tpu.matmul %113, %115, %cst_64 {dimension_numbers = #tpu.dot_dimension_numbers<[1], [0], [0], [1], [0, 0, 1, 1], [], []>} : vector<17x32xbf16>, vector<32x32xbf16>, vector<17x32xf32> -> vector<17x32xf32>
    %c0_65 = arith.constant 0 : index
    %c0_66 = arith.constant 0 : index
    %c0_67 = arith.constant 0 : index
    %117 = vector.load %arg8[%c0_65, %c0_66, %c0_67] : memref<1x1x32xf32, #tpu.memory_space<vmem>>, vector<1x1x32xf32>
    %118 = vector.shape_cast %117 : vector<1x1x32xf32> to vector<1x32xf32>
    %119 = vector.broadcast %118 : vector<1x32xf32> to vector<17x32xf32>
    %120 = arith.addf %116, %119 : vector<17x32xf32>
    %121 = arith.addf %4, %120 : vector<17x32xf32>
    %c0_68 = arith.constant 0 : index
    %c0_69 = arith.constant 0 : index
    %c0_70 = arith.constant 0 : index
    %122 = vector.load %arg9[%c0_68, %c0_69, %c0_70] : memref<1x1x32xf32, #tpu.memory_space<vmem>>, vector<1x1x32xf32>
    %123 = vector.shape_cast %122 : vector<1x1x32xf32> to vector<1x32xf32>
    %c0_71 = arith.constant 0 : index
    %c0_72 = arith.constant 0 : index
    %c0_73 = arith.constant 0 : index
    %124 = vector.load %arg10[%c0_71, %c0_72, %c0_73] : memref<1x1x32xf32, #tpu.memory_space<vmem>>, vector<1x1x32xf32>
    %125 = vector.shape_cast %124 : vector<1x1x32xf32> to vector<1x32xf32>
    %cst_74 = arith.constant dense<0.000000e+00> : vector<17xf32>
    %126 = vector.multi_reduction <add>, %121, %cst_74 [1] : vector<17x32xf32> to vector<17xf32>
    %127 = vector.shape_cast %126 : vector<17xf32> to vector<17x1xf32>
    %cst_75 = arith.constant 3.200000e+01 : f32
    %128 = vector.broadcast %cst_75 : f32 to vector<17x1xf32>
    %129 = arith.divf %127, %128 : vector<17x1xf32>
    %130 = vector.broadcast %129 : vector<17x1xf32> to vector<17x32xf32>
    %131 = arith.subf %121, %130 : vector<17x32xf32>
    %132 = arith.mulf %131, %131 : vector<17x32xf32>
    %cst_76 = arith.constant dense<0.000000e+00> : vector<17xf32>
    %133 = vector.multi_reduction <add>, %132, %cst_76 [1] : vector<17x32xf32> to vector<17xf32>
    %134 = vector.shape_cast %133 : vector<17xf32> to vector<17x1xf32>
    %cst_77 = arith.constant 3.200000e+01 : f32
    %135 = vector.broadcast %cst_77 : f32 to vector<17x1xf32>
    %136 = arith.divf %134, %135 : vector<17x1xf32>
    %137 = vector.broadcast %129 : vector<17x1xf32> to vector<17x32xf32>
    %138 = arith.subf %121, %137 : vector<17x32xf32>
    %cst_78 = arith.constant 9.99999974E-6 : f32
    %139 = vector.broadcast %cst_78 : f32 to vector<17x1xf32>
    %140 = arith.addf %136, %139 : vector<17x1xf32>
    %141 = math.rsqrt %140 : vector<17x1xf32>
    %142 = vector.broadcast %141 : vector<17x1xf32> to vector<17x32xf32>
    %143 = arith.mulf %138, %142 : vector<17x32xf32>
    %144 = vector.broadcast %123 : vector<1x32xf32> to vector<17x32xf32>
    %145 = arith.mulf %143, %144 : vector<17x32xf32>
    %146 = vector.broadcast %125 : vector<1x32xf32> to vector<17x32xf32>
    %147 = arith.addf %145, %146 : vector<17x32xf32>
    %148 = arith.truncf %147 : vector<17x32xf32> to vector<17x32xbf16>
    %c0_79 = arith.constant 0 : index
    %c0_80 = arith.constant 0 : index
    %c0_81 = arith.constant 0 : index
    %149 = vector.load %arg11[%c0_79, %c0_80, %c0_81] : memref<1x32x128xbf16, #tpu.memory_space<vmem>>, vector<1x32x128xbf16>
    %150 = vector.shape_cast %149 : vector<1x32x128xbf16> to vector<32x128xbf16>
    %cst_82 = arith.constant dense<0.000000e+00> : vector<17x128xf32>
    %151 = tpu.matmul %148, %150, %cst_82 {dimension_numbers = #tpu.dot_dimension_numbers<[1], [0], [0], [1], [0, 0, 1, 1], [], []>} : vector<17x32xbf16>, vector<32x128xbf16>, vector<17x128xf32> -> vector<17x128xf32>
    %c0_83 = arith.constant 0 : index
    %c0_84 = arith.constant 0 : index
    %c0_85 = arith.constant 0 : index
    %152 = vector.load %arg12[%c0_83, %c0_84, %c0_85] : memref<1x1x128xf32, #tpu.memory_space<vmem>>, vector<1x1x128xf32>
    %153 = vector.shape_cast %152 : vector<1x1x128xf32> to vector<1x128xf32>
    %154 = vector.broadcast %153 : vector<1x128xf32> to vector<17x128xf32>
    %155 = arith.addf %151, %154 : vector<17x128xf32>
    %cst_86 = arith.constant 1.702000e+00 : f32
    %156 = vector.broadcast %cst_86 : f32 to vector<17x128xf32>
    %157 = arith.mulf %156, %155 : vector<17x128xf32>
    %158 = arith.negf %157 : vector<17x128xf32>
    %159 = math.exp %158 : vector<17x128xf32>
    %cst_87 = arith.constant 1.000000e+00 : f32
    %160 = vector.broadcast %cst_87 : f32 to vector<17x128xf32>
    %161 = arith.addf %160, %159 : vector<17x128xf32>
    %162 = arith.divf %160, %161 : vector<17x128xf32>
    %163 = arith.mulf %155, %162 : vector<17x128xf32>
    %164 = arith.truncf %163 : vector<17x128xf32> to vector<17x128xbf16>
    %c0_88 = arith.constant 0 : index
    %c0_89 = arith.constant 0 : index
    %c0_90 = arith.constant 0 : index
    %165 = vector.load %arg13[%c0_88, %c0_89, %c0_90] : memref<1x128x32xbf16, #tpu.memory_space<vmem>>, vector<1x128x32xbf16>
    %166 = vector.shape_cast %165 : vector<1x128x32xbf16> to vector<128x32xbf16>
    %cst_91 = arith.constant dense<0.000000e+00> : vector<17x32xf32>
    %167 = tpu.matmul %164, %166, %cst_91 {dimension_numbers = #tpu.dot_dimension_numbers<[1], [0], [0], [1], [0, 0, 1, 1], [], []>} : vector<17x128xbf16>, vector<128x32xbf16>, vector<17x32xf32> -> vector<17x32xf32>
    %c0_92 = arith.constant 0 : index
    %c0_93 = arith.constant 0 : index
    %c0_94 = arith.constant 0 : index
    %168 = vector.load %arg14[%c0_92, %c0_93, %c0_94] : memref<1x1x32xf32, #tpu.memory_space<vmem>>, vector<1x1x32xf32>
    %169 = vector.shape_cast %168 : vector<1x1x32xf32> to vector<1x32xf32>
    %170 = vector.broadcast %169 : vector<1x32xf32> to vector<17x32xf32>
    %171 = arith.addf %167, %170 : vector<17x32xf32>
    %172 = arith.addf %121, %171 : vector<17x32xf32>
    %c0_95 = arith.constant 0 : index
    %c0_96 = arith.constant 0 : index
    %c0_97 = arith.constant 0 : index
    %173 = vector.load %arg15[%c0_95, %c0_96, %c0_97] : memref<1x17x32xf32, #tpu.memory_space<vmem>>, vector<1x17x32xf32>
    %174 = vector.shape_cast %173 : vector<1x17x32xf32> to vector<17x32xf32>
    %175 = vector.shape_cast %172 : vector<17x32xf32> to vector<1x17x32xf32>
    tpu.vector_store %arg15[%c0_95, %c0_96, %c0_97], %175 {strides = array<i32>} : memref<1x17x32xf32, #tpu.memory_space<vmem>>, vector<1x17x32xf32>,
    return
  }
  func.func @transform_0(%arg0: i32, %arg1: i32) -> (i32, i32, i32) {
    %c0_i32 = arith.constant 0 : i32
    %c0_i32_0 = arith.constant 0 : i32
    %c0_i32_1 = arith.constant 0 : i32
    return %arg0, %c0_i32, %c0_i32_0 : i32, i32, i32
  }
  func.func @transform_1(%arg0: i32, %arg1: i32) -> (i32, i32, i32) {
    %c0_i32 = arith.constant 0 : i32
    %c0_i32_0 = arith.constant 0 : i32
    %c0_i32_1 = arith.constant 0 : i32
    return %arg1, %c0_i32, %c0_i32_0 : i32, i32, i32
  }
  func.func @transform_2(%arg0: i32, %arg1: i32) -> (i32, i32, i32) {
    %c0_i32 = arith.constant 0 : i32
    %c0_i32_0 = arith.constant 0 : i32
    %c0_i32_1 = arith.constant 0 : i32
    return %arg1, %c0_i32, %c0_i32_0 : i32, i32, i32
  }
  func.func @transform_3(%arg0: i32, %arg1: i32) -> (i32, i32, i32) {
    %c0_i32 = arith.constant 0 : i32
    %c0_i32_0 = arith.constant 0 : i32
    %c0_i32_1 = arith.constant 0 : i32
    return %arg1, %c0_i32, %c0_i32_0 : i32, i32, i32
  }
  func.func @transform_4(%arg0: i32, %arg1: i32) -> (i32, i32, i32) {
    %c0_i32 = arith.constant 0 : i32
    %c0_i32_0 = arith.constant 0 : i32
    %c0_i32_1 = arith.constant 0 : i32
    return %arg1, %c0_i32, %c0_i32_0 : i32, i32, i32
  }
  func.func @transform_5(%arg0: i32, %arg1: i32) -> (i32, i32, i32) {
    %c0_i32 = arith.constant 0 : i32
    %c0_i32_0 = arith.constant 0 : i32
    %c0_i32_1 = arith.constant 0 : i32
    return %arg1, %c0_i32, %c0_i32_0 : i32, i32, i32
  }
  func.func @transform_6(%arg0: i32, %arg1: i32) -> (i32, i32, i32) {
    %c0_i32 = arith.constant 0 : i32
    %c0_i32_0 = arith.constant 0 : i32
    %c0_i32_1 = arith.constant 0 : i32
    return %arg1, %c0_i32, %c0_i32_0 : i32, i32, i32
  }
  func.func @transform_7(%arg0: i32, %arg1: i32) -> (i32, i32, i32) {
    %c0_i32 = arith.constant 0 : i32
    %c0_i32_0 = arith.constant 0 : i32
    %c0_i32_1 = arith.constant 0 : i32
    return %arg1, %c0_i32, %c0_i32_0 : i32, i32, i32
  }
  func.func @transform_8(%arg0: i32, %arg1: i32) -> (i32, i32, i32) {
    %c0_i32 = arith.constant 0 : i32
    %c0_i32_0 = arith.constant 0 : i32
    %c0_i32_1 = arith.constant 0 : i32
    return %arg1, %c0_i32, %c0_i32_0 : i32, i32, i32
  }
  func.func @transform_9(%arg0: i32, %arg1: i32) -> (i32, i32, i32) {
    %c0_i32 = arith.constant 0 : i32
    %c0_i32_0 = arith.constant 0 : i32
    %c0_i32_1 = arith.constant 0 : i32
    return %arg1, %c0_i32, %c0_i32_0 : i32, i32, i32
  }
  func.func @transform_10(%arg0: i32, %arg1: i32) -> (i32, i32, i32) {
    %c0_i32 = arith.constant 0 : i32
    %c0_i32_0 = arith.constant 0 : i32
    %c0_i32_1 = arith.constant 0 : i32
    return %arg1, %c0_i32, %c0_i32_0 : i32, i32, i32
  }
  func.func @transform_11(%arg0: i32, %arg1: i32) -> (i32, i32, i32) {
    %c0_i32 = arith.constant 0 : i32
    %c0_i32_0 = arith.constant 0 : i32
    %c0_i32_1 = arith.constant 0 : i32
    return %arg1, %c0_i32, %c0_i32_0 : i32, i32, i32
  }
  func.func @transform_12(%arg0: i32, %arg1: i32) -> (i32, i32, i32) {
    %c0_i32 = arith.constant 0 : i32
    %c0_i32_0 = arith.constant 0 : i32
    %c0_i32_1 = arith.constant 0 : i32
    return %arg1, %c0_i32, %c0_i32_0 : i32, i32, i32
  }
  func.func @transform_13(%arg0: i32, %arg1: i32) -> (i32, i32, i32) {
    %c0_i32 = arith.constant 0 : i32
    %c0_i32_0 = arith.constant 0 : i32
    %c0_i32_1 = arith.constant 0 : i32
    return %arg0, %c0_i32, %c0_i32_0 : i32, i32, i32
  }
}

module attributes {stable_mosaic.version = 11 : i64} {
  func.func @_ln_kernel(%arg0: i32, %arg1: memref<2x32xf32, #tpu.memory_space<vmem>>, %arg2: memref<1x32xf32, #tpu.memory_space<vmem>>, %arg3: memref<1x32xf32, #tpu.memory_space<vmem>>, %arg4: memref<2x32xf32, #tpu.memory_space<vmem>>) attributes {dimension_semantics = [#tpu.dimension_semantics<parallel>], iteration_bounds = array<i64: 1>, scalar_prefetch = 0 : i64, scratch_operands = 0 : i64, tpu.core_type = #tpu.core_type<tc>, window_params = [{transform_indices = @transform_0, window_bounds = array<i64: 2, 32>}, {pipeline_mode = #tpu.pipeline_mode<synchronous>, transform_indices = @transform_1, window_bounds = array<i64: 1, 32>}, {pipeline_mode = #tpu.pipeline_mode<synchronous>, transform_indices = @transform_2, window_bounds = array<i64: 1, 32>}, {transform_indices = @transform_3, window_bounds = array<i64: 2, 32>}]} {
    %c0 = arith.constant 0 : index
    %c0_0 = arith.constant 0 : index
    %0 = vector.load %arg1[%c0, %c0_0] : memref<2x32xf32, #tpu.memory_space<vmem>>, vector<2x32xf32>
    %cst = arith.constant dense<0.000000e+00> : vector<2xf32>
    %1 = vector.multi_reduction <add>, %0, %cst [1] : vector<2x32xf32> to vector<2xf32>
    %2 = vector.shape_cast %1 : vector<2xf32> to vector<2x1xf32>
    %cst_1 = arith.constant 3.200000e+01 : f32
    %3 = vector.broadcast %cst_1 : f32 to vector<2x1xf32>
    %4 = arith.divf %2, %3 : vector<2x1xf32>
    %5 = vector.broadcast %4 : vector<2x1xf32> to vector<2x32xf32>
    %6 = arith.subf %0, %5 : vector<2x32xf32>
    %7 = arith.mulf %6, %6 : vector<2x32xf32>
    %cst_2 = arith.constant dense<0.000000e+00> : vector<2xf32>
    %8 = vector.multi_reduction <add>, %7, %cst_2 [1] : vector<2x32xf32> to vector<2xf32>
    %9 = vector.shape_cast %8 : vector<2xf32> to vector<2x1xf32>
    %cst_3 = arith.constant 3.200000e+01 : f32
    %10 = vector.broadcast %cst_3 : f32 to vector<2x1xf32>
    %11 = arith.divf %9, %10 : vector<2x1xf32>
    %12 = vector.broadcast %4 : vector<2x1xf32> to vector<2x32xf32>
    %13 = arith.subf %0, %12 : vector<2x32xf32>
    %cst_4 = arith.constant 9.99999974E-6 : f32
    %14 = vector.broadcast %cst_4 : f32 to vector<2x1xf32>
    %15 = arith.addf %11, %14 : vector<2x1xf32>
    %16 = math.rsqrt %15 : vector<2x1xf32>
    %17 = vector.broadcast %16 : vector<2x1xf32> to vector<2x32xf32>
    %18 = arith.mulf %13, %17 : vector<2x32xf32>
    %c0_5 = arith.constant 0 : index
    %c0_6 = arith.constant 0 : index
    %19 = vector.load %arg2[%c0_5, %c0_6] : memref<1x32xf32, #tpu.memory_space<vmem>>, vector<1x32xf32>
    %20 = vector.broadcast %19 : vector<1x32xf32> to vector<2x32xf32>
    %21 = arith.mulf %18, %20 : vector<2x32xf32>
    %c0_7 = arith.constant 0 : index
    %c0_8 = arith.constant 0 : index
    %22 = vector.load %arg3[%c0_7, %c0_8] : memref<1x32xf32, #tpu.memory_space<vmem>>, vector<1x32xf32>
    %23 = vector.broadcast %22 : vector<1x32xf32> to vector<2x32xf32>
    %24 = arith.addf %21, %23 : vector<2x32xf32>
    %c0_9 = arith.constant 0 : index
    %c0_10 = arith.constant 0 : index
    %25 = vector.load %arg4[%c0_9, %c0_10] : memref<2x32xf32, #tpu.memory_space<vmem>>, vector<2x32xf32>
    tpu.vector_store %arg4[%c0_9, %c0_10], %24 {strides = array<i32>} : memref<2x32xf32, #tpu.memory_space<vmem>>, vector<2x32xf32>,
    return
  }
  func.func @transform_0(%arg0: i32) -> (i32, i32) {
    %c0_i32 = arith.constant 0 : i32
    %c0_i32_0 = arith.constant 0 : i32
    return %arg0, %c0_i32 : i32, i32
  }
  func.func @transform_1(%arg0: i32) -> (i32, i32) {
    %c0_i32 = arith.constant 0 : i32
    %c0_i32_0 = arith.constant 0 : i32
    %c0_i32_1 = arith.constant 0 : i32
    return %c0_i32, %c0_i32_0 : i32, i32
  }
  func.func @transform_2(%arg0: i32) -> (i32, i32) {
    %c0_i32 = arith.constant 0 : i32
    %c0_i32_0 = arith.constant 0 : i32
    %c0_i32_1 = arith.constant 0 : i32
    return %c0_i32, %c0_i32_0 : i32, i32
  }
  func.func @transform_3(%arg0: i32) -> (i32, i32) {
    %c0_i32 = arith.constant 0 : i32
    %c0_i32_0 = arith.constant 0 : i32
    return %arg0, %c0_i32 : i32, i32
  }
}

</mosaic_0001>

<llo_original>
// kernel: vision_transformer_forward.5
$region0: #{vision_transformer_forward.5}
  #allocation0 [shape = 'u32[]', space=smem, size = 0x4, offset = 0x4, fixed_abs, tag = 'smem constant byte address 0x4 - core index']
  #allocation1 [shape = 'u32[72,128]{1,0:T(1,128)}', space=vmem, size = 0x9000, scoped, tag = 'internal scratch']
  %s0 = inlined_call_operand.vmem [shape: f32[34,32], index: 0, kind: input, shape index: {}]
  %s1 = inlined_call_operand.vmem [shape: f32[1,32], index: 1, kind: input, shape index: {}]
  %s2 = inlined_call_operand.vmem [shape: f32[1,32], index: 2, kind: input, shape index: {}]
  %s3 = inlined_call_operand.vmem [shape: f32[34,32], index: 3, kind: output, shape index: {}]
  %s4 = sld [smem:[#allocation0]]
  $region22: #{vision_transformer_forward.5} parent=0
    _
  %s6 = ssub.s32 1, %s4
  %s7 = scalar_select 0, %s6, %s4
  // Predicated region
  $region2: #{vision_transformer_forward.5} parent=0 // pred_check
    _
  $region3: #{vision_transformer_forward.5} parent=0 // pred_check_branch
    %9 = sbr.rel (0) target = $region5
  $region4: #{vision_transformer_forward.5} parent=0 // pred_region
    _
  $region5: #{vision_transformer_forward.5} parent=0 // pred_fallthru
    _
  // Predicated region
  $region6: #{vision_transformer_forward.5} parent=0 // pred_check
    _
  $region7: #{vision_transformer_forward.5} parent=0 // pred_check_branch
    %11 = sbr.rel (0) target = $region9
  $region8: #{vision_transformer_forward.5} parent=0 // pred_region
    _
  $region9: #{vision_transformer_forward.5} parent=0 // pred_fallthru
    _
  // Predicated region
  $region10: #{vision_transformer_forward.5} parent=0 // pred_check
    _
  $region11: #{vision_transformer_forward.5} parent=0 // pred_check_branch
    %13 = sbr.rel (0) target = $region13
  $region12: #{vision_transformer_forward.5} parent=0 // pred_region
    _
  $region13: #{vision_transformer_forward.5} parent=0 // pred_fallthru
    _
  %v14 = vld [vmem:[%s0] sm:$0xff]
  %v15 = vld [vmem:[%s0 + $0x8] sm:$0xff]
  %v16 = vld [vmem:[%s0 + $0x10] sm:$0xff]
  %v17 = vld [vmem:[%s0 + $0x18] sm:$0xff]
  %v18 = vld [vmem:[%s0 + $0x20] sm:$0x3]
  %vm19 = vcmask 261120
  %v20 = vsel %vm19, %v14, 0.0
  %21 = vadd.xlane.f32.xlu0 %v20
  %v22 = vpop.xlane.xlu0 %21
  %v23 = vsel %vm19, %v15, 0.0
  %24 = vadd.xlane.f32.xlu0 %v23
  %v25 = vpop.xlane.xlu0 %24
  %v26 = vsel %vm19, %v16, 0.0
  %27 = vadd.xlane.f32.xlu0 %v26
  %v28 = vpop.xlane.xlu0 %27
  %v29 = vsel %vm19, %v17, 0.0
  %30 = vadd.xlane.f32.xlu0 %v29
  %v31 = vpop.xlane.xlu0 %30
  %vm32 = vcmask 254976
  %v33 = vsel %vm32, %v18, 0.0
  %34 = vadd.xlane.f32.xlu0 %v33
  %v35 = vpop.xlane.xlu0 %34
  %v36 = vrcp.pop 32.0
  %v37 = vmul.f32 32.0, %v36
  %v38 = vsub.f32 1.0, %v37
  %v39 = vmul.f32 %v36, %v38
  %v40 = vadd.f32 %v36, %v39
  %vm41 = vweird.f32 %v36
  %v42 = vsel %vm41, %v36, %v40
  %v43 = vmul.f32 %v22, %v42
  %v44 = vmul.f32 %v25, %v42
  %v45 = vmul.f32 %v28, %v42
  %v46 = vmul.f32 %v31, %v42
  %v47 = vmul.f32 %v35, %v42
  %v48 = vsub.f32 %v14, %v43
  %v49 = vsub.f32 %v15, %v44
  %v50 = vsub.f32 %v16, %v45
  %v51 = vsub.f32 %v17, %v46
  %v52 = vsub.f32 %v18, %v47
  %v53 = vmul.f32 %v48, %v48
  %v54 = vmul.f32 %v49, %v49
  %v55 = vmul.f32 %v50, %v50
  %v56 = vmul.f32 %v51, %v51
  %v57 = vmul.f32 %v52, %v52
  %v58 = vsel %vm19, %v53, 0.0
  %59 = vadd.xlane.f32.xlu0 %v58
  %v60 = vpop.xlane.xlu0 %59
  %v61 = vsel %vm19, %v54, 0.0
  %62 = vadd.xlane.f32.xlu0 %v61
  %v63 = vpop.xlane.xlu0 %62
  %v64 = vsel %vm19, %v55, 0.0
  %65 = vadd.xlane.f32.xlu0 %v64
  %v66 = vpop.xlane.xlu0 %65
  %v67 = vsel %vm19, %v56, 0.0
  %68 = vadd.xlane.f32.xlu0 %v67
  %v69 = vpop.xlane.xlu0 %68
  %v70 = vsel %vm32, %v57, 0.0
  %71 = vadd.xlane.f32.xlu0 %v70
  %v72 = vpop.xlane.xlu0 %71
  %v73 = vmul.f32 %v60, %v42
  %v74 = vmul.f32 %v63, %v42
  %v75 = vmul.f32 %v66, %v42
  %v76 = vmul.f32 %v69, %v42
  %v77 = vmul.f32 %v72, %v42
  %v78 = vadd.f32 %v73, 1e-05
  %v79 = vadd.f32 %v74, 1e-05
  %v80 = vadd.f32 %v75, 1e-05
  %v81 = vadd.f32 %v76, 1e-05
  %v82 = vadd.f32 %v77, 1e-05
  %v83 = vrsqrt.pop %v78
  %v84 = vmul.f32 %v83, %v78
  %v85 = vmul.f32 %v84, %v83
  %v86 = vmul.f32 0.5, %v85
  %v87 = vsub.f32 1.5, %v86
  %v88 = vmul.f32 %v83, %v87
  %vm89 = vweird.f32 %v78
  %vm90 = vweird.f32 %v83
  %vm91 = vmor %vm89, %vm90
  %v92 = vsel %vm91, %v83, %v88
  %v93 = vrsqrt.pop %v79
  %v94 = vmul.f32 %v93, %v79
  %v95 = vmul.f32 %v94, %v93
  %v96 = vmul.f32 0.5, %v95
  %v97 = vsub.f32 1.5, %v96
  %v98 = vmul.f32 %v93, %v97
  %vm99 = vweird.f32 %v79
  %vm100 = vweird.f32 %v93
  %vm101 = vmor %vm99, %vm100
  %v102 = vsel %vm101, %v93, %v98
  %v103 = vrsqrt.pop %v80
  %v104 = vmul.f32 %v103, %v80
  %v105 = vmul.f32 %v104, %v103
  %v106 = vmul.f32 0.5, %v105
  %v107 = vsub.f32 1.5, %v106
  %v108 = vmul.f32 %v103, %v107
  %vm109 = vweird.f32 %v80
  %vm110 = vweird.f32 %v103
  %vm111 = vmor %vm109, %vm110
  %v112 = vsel %vm111, %v103, %v108
  %v113 = vrsqrt.pop %v81
  %v114 = vmul.f32 %v113, %v81
  %v115 = vmul.f32 %v114, %v113
  %v116 = vmul.f32 0.5, %v115
  %v117 = vsub.f32 1.5, %v116
  %v118 = vmul.f32 %v113, %v117
  %vm119 = vweird.f32 %v81
  %vm120 = vweird.f32 %v113
  %vm121 = vmor %vm119, %vm120
  %v122 = vsel %vm121, %v113, %v118
  %v123 = vrsqrt.pop %v82
  %v124 = vmul.f32 %v123, %v82
  %v125 = vmul.f32 %v124, %v123
  %v126 = vmul.f32 0.5, %v125
  %v127 = vsub.f32 1.5, %v126
  %v128 = vmul.f32 %v123, %v127
  %vm129 = vweird.f32 %v82
  %vm130 = vweird.f32 %v123
  %vm131 = vmor %vm129, %vm130
  %v132 = vsel %vm131, %v123, %v128
  %v133 = vmul.f32 %v48, %v92
  %v134 = vmul.f32 %v49, %v102
  %v135 = vmul.f32 %v50, %v112
  %v136 = vmul.f32 %v51, %v122
  %v137 = vmul.f32 %v52, %v132
  %v138 = vld [vmem:[%s1] sm:$0x1]
  %v140 = vperm.slane %v138, 0
  %v142 = vmul.f32 %v133, %v140
  %v143 = vmul.f32 %v134, %v140
  %v144 = vmul.f32 %v135, %v140
  %v145 = vmul.f32 %v136, %v140
  %v146 = vmul.f32 %v137, %v140
  %v147 = vld [vmem:[%s2] sm:$0x1]
  %v149 = vperm.slane %v147, 0
  %v151 = vadd.f32 %v142, %v149
  %v152 = vadd.f32 %v143, %v149
  %v153 = vadd.f32 %v144, %v149
  %v154 = vadd.f32 %v145, %v149
  %v155 = vadd.f32 %v146, %v149
  %156 = vst.msk [vmem:[%s3] sm:$0xff] %vm19, %v151
  %157 = vst.msk [vmem:[%s3 + $0x8] sm:$0xff] %vm19, %v152
  %158 = vst.msk [vmem:[%s3 + $0x10] sm:$0xff] %vm19, %v153
  %159 = vst.msk [vmem:[%s3 + $0x18] sm:$0xff] %vm19, %v154
  %160 = vst.msk [vmem:[%s3 + $0x20] sm:$0x3] %vm32, %v155
  // Predicated region
  $region14: #{vision_transformer_forward.5} parent=0 // pred_check
    _
  $region15: #{vision_transformer_forward.5} parent=0 // pred_check_branch
    %162 = sbr.rel (0) target = $region17
  $region16: #{vision_transformer_forward.5} parent=0 // pred_region
    _
  $region17: #{vision_transformer_forward.5} parent=0 // pred_fallthru
    _
  // Predicated region
  $region18: #{vision_transformer_forward.5} parent=0 // pred_check
    _
  $region19: #{vision_transformer_forward.5} parent=0 // pred_check_branch
    %164 = sbr.rel (0) target = $region21
  $region20: #{vision_transformer_forward.5} parent=0 // pred_region
    _
  $region21: #{vision_transformer_forward.5} parent=0 // pred_fallthru
    _

// kernel: vision_transformer_forward.4
$region0: #{vision_transformer_forward.4}
  #allocation0 [shape = 'u32[]', space=smem, size = 0x4, offset = 0x4, fixed_abs, tag = 'smem constant byte address 0x4 - core index']
  #allocation1 [shape = 'u32[72,128]{1,0:T(1,128)}', space=vmem, size = 0x9000, scoped, tag = 'internal scratch']
  %s0 = inlined_call_operand.vmem [shape: bf16[32,48], index: 0, kind: input, shape index: {}]
  %s1 = inlined_call_operand.vmem [shape: bf16[48,32], index: 1, kind: input, shape index: {}]
  %s2 = inlined_call_operand.vmem [shape: f32[32,32], index: 2, kind: output, shape index: {}]
  %s3 = sld [smem:[#allocation0]]
  $region18: #{vision_transformer_forward.4} parent=0
    _
  %s5 = ssub.s32 1, %s3
  %s6 = scalar_select 0, %s5, %s3
  // Predicated region
  $region2: #{vision_transformer_forward.4} parent=0 // pred_check
    _
  $region3: #{vision_transformer_forward.4} parent=0 // pred_check_branch
    %8 = sbr.rel (0) target = $region5
  $region4: #{vision_transformer_forward.4} parent=0 // pred_region
    _
  $region5: #{vision_transformer_forward.4} parent=0 // pred_fallthru
    _
  // Predicated region
  $region6: #{vision_transformer_forward.4} parent=0 // pred_check
    _
  $region7: #{vision_transformer_forward.4} parent=0 // pred_check_branch
    %10 = sbr.rel (0) target = $region9
  $region8: #{vision_transformer_forward.4} parent=0 // pred_region
    _
  $region9: #{vision_transformer_forward.4} parent=0 // pred_fallthru
    _
  %v12 = vld [vmem:[%s0] sm:$0xf]
  %v13 = vld [vmem:[%s0 + $0x4] sm:$0xf]
  %v14 = vld [vmem:[%s0 + $0x8] sm:$0xf]
  %v15 = vld [vmem:[%s0 + $0xc] sm:$0xf]
  %v16 = vld [vmem:[%s1] sm:$0xf]
  %v17 = vld [vmem:[%s1 + $0x4] sm:$0xf]
  %v18 = vld [vmem:[%s1 + $0x8] sm:$0xf]
  %v19 = vld [vmem:[%s1 + $0xc] sm:$0xf]
  %v20 = vld [vmem:[%s1 + $0x10] sm:$0xf]
  %v21 = vld [vmem:[%s1 + $0x14] sm:$0xf]
  %v26 = vunpack.c.l.b16 %v12
  %v27 = vunpack.c.l.b16 %v13
  %v28 = vunpack.c.l.b16 %v14
  %v29 = vunpack.c.l.b16 %v15
  %v30 = vpack.c.b16 %v27, %v26
  %v31 = vpack.c.b16 %v29, %v28
  %v38 = vunpack.c.l.b16 %v16
  %v39 = vunpack.c.l.b16 %v17
  %v40 = vunpack.c.l.b16 %v18
  %v41 = vunpack.c.l.b16 %v19
  %v42 = vunpack.c.l.b16 %v20
  %v43 = vunpack.c.l.b16 %v21
  %v44 = vpack.c.b16 %v39, %v38
  %v45 = vpack.c.b16 %v41, %v40
  %v46 = vpack.c.b16 %v43, %v42
  %vm50 = vcmask 392192
  %v52 = vsel %vm50, %v30, 0
  %v55 = vsel %vm50, %v31, 0
  %57 = vmatpush.bf16.msra.mxu0 0
  %58 = vmatpush.bf16.msra.mxu0 0
  %59 = vmatpush.bf16.msra.mxu0 0
  %60 = vmatpush.bf16.msra.mxu0 0
  %61 = vmatpush.bf16.msra.mxu0 0
  %62 = vmatpush.bf16.msra.mxu0 %v46
  %63 = vmatpush.bf16.msra.mxu0 %v45
  %64 = vmatpush.bf16.msra.mxu0 %v44
  %65 = vmatmul.bf16.gmra.mxu0 %v52
  %v66 = vpop.f32.mrf.mxu0
  %v67 = vadd.f32 0.0, %v66
  %v68 = vpop.f32.mrf.mxu0
  %v69 = vadd.f32 0.0, %v68
  %70 = vmatmul.bf16.gmra.mxu0 %v55
  %v71 = vpop.f32.mrf.mxu0
  %v72 = vadd.f32 0.0, %v71
  %v73 = vpop.f32.mrf.mxu0
  %v74 = vadd.f32 0.0, %v73
  %75 = vdwg.mxu0
  %vm76 = vcmask 261120
  %77 = vst.msk [vmem:[%s2] sm:$0xff] %vm76, %v67
  %78 = vst.msk [vmem:[%s2 + $0x8] sm:$0xff] %vm76, %v69
  %79 = vst.msk [vmem:[%s2 + $0x10] sm:$0xff] %vm76, %v72
  %80 = vst.msk [vmem:[%s2 + $0x18] sm:$0xff] %vm76, %v74
  // Predicated region
  $region10: #{vision_transformer_forward.4} parent=0 // pred_check
    _
  $region11: #{vision_transformer_forward.4} parent=0 // pred_check_branch
    %82 = sbr.rel (0) target = $region13
  $region12: #{vision_transformer_forward.4} parent=0 // pred_region
    _
  $region13: #{vision_transformer_forward.4} parent=0 // pred_fallthru
    _
  // Predicated region
  $region14: #{vision_transformer_forward.4} parent=0 // pred_check
    _
  $region15: #{vision_transformer_forward.4} parent=0 // pred_check_branch
    %84 = sbr.rel (0) target = $region17
  $region16: #{vision_transformer_forward.4} parent=0 // pred_region
    _
  $region17: #{vision_transformer_forward.4} parent=0 // pred_fallthru
    _

// kernel: vision_transformer_forward.7
$region0: #{vision_transformer_forward.7}
  #allocation0 [shape = 'u32[]', space=smem, size = 0x4, offset = 0x4, fixed_abs, tag = 'smem constant byte address 0x4 - core index']
  #allocation1 [shape = 'u32[72,128]{1,0:T(1,128)}', space=vmem, size = 0x9000, scoped, tag = 'internal scratch']
  %s0 = inlined_call_operand.vmem [shape: f32[2,32], index: 0, kind: input, shape index: {}]
  %s1 = inlined_call_operand.vmem [shape: f32[1,32], index: 1, kind: input, shape index: {}]
  %s2 = inlined_call_operand.vmem [shape: f32[1,32], index: 2, kind: input, shape index: {}]
  %s3 = inlined_call_operand.hbm [shape: f32[2,32], index: 3, kind: output, shape index: {}]
  %s4 = sld [smem:[#allocation0]]
  $region22: #{vision_transformer_forward.7} parent=0
    _
  %s6 = ssub.s32 1, %s4
  %s7 = scalar_select 0, %s6, %s4
  $region1: #{vision_transformer_forward.7} parent=0
    #allocation2 [shape = 'u8[1024]{0}', space=vmem, size = 0x400, scoped, tag = 'output window, operand 0, single buffered']
    #allocation3 [shape = 's32[1]{0}', space=sflag, size = 0x4, scoped, tag = 'scoped memory for vision_transformer_forward.7']
    %8 = vsyncpa [#allocation3], 0
    // Predicated region
    $region2: #{vision_transformer_forward.7} parent=1 // pred_check
      _
    $region3: #{vision_transformer_forward.7} parent=1 // pred_check_branch
      %10 = sbr.rel (0) target = $region5
    $region4: #{vision_transformer_forward.7} parent=1 // pred_region
      _
    $region5: #{vision_transformer_forward.7} parent=1 // pred_fallthru
      _
    // Predicated region
    $region6: #{vision_transformer_forward.7} parent=1 // pred_check
      _
    $region7: #{vision_transformer_forward.7} parent=1 // pred_check_branch
      %12 = sbr.rel (0) target = $region9
    $region8: #{vision_transformer_forward.7} parent=1 // pred_region
      _
    $region9: #{vision_transformer_forward.7} parent=1 // pred_fallthru
      _
    // Predicated region
    $region10: #{vision_transformer_forward.7} parent=1 // pred_check
      _
    $region11: #{vision_transformer_forward.7} parent=1 // pred_check_branch
      %14 = sbr.rel (0) target = $region13
    $region12: #{vision_transformer_forward.7} parent=1 // pred_region
      _
    $region13: #{vision_transformer_forward.7} parent=1 // pred_fallthru
      _
    %v15 = vld [vmem:[%s0] sm:$0x3]
    %vm16 = vcmask 254976
    %v17 = vsel %vm16, %v15, 0.0
    %18 = vadd.xlane.f32.xlu0 %v17
    %v19 = vpop.xlane.xlu0 %18
    %v20 = vrcp.pop 32.0
    %v21 = vmul.f32 32.0, %v20
    %v22 = vsub.f32 1.0, %v21
    %v23 = vmul.f32 %v20, %v22
    %v24 = vadd.f32 %v20, %v23
    %vm25 = vweird.f32 %v20
    %v26 = vsel %vm25, %v20, %v24
    %v27 = vmul.f32 %v19, %v26
    %v28 = vsub.f32 %v15, %v27
    %v29 = vmul.f32 %v28, %v28
    %v30 = vsel %vm16, %v29, 0.0
    %31 = vadd.xlane.f32.xlu0 %v30
    %v32 = vpop.xlane.xlu0 %31
    %v33 = vmul.f32 %v32, %v26
    %v34 = vadd.f32 %v33, 1e-05
    %v35 = vrsqrt.pop %v34
    %v36 = vmul.f32 %v35, %v34
    %v37 = vmul.f32 %v36, %v35
    %v38 = vmul.f32 0.5, %v37
    %v39 = vsub.f32 1.5, %v38
    %v40 = vmul.f32 %v35, %v39
    %vm41 = vweird.f32 %v34
    %vm42 = vweird.f32 %v35
    %vm43 = vmor %vm41, %vm42
    %v44 = vsel %vm43, %v35, %v40
    %v45 = vmul.f32 %v28, %v44
    %v46 = vld [vmem:[%s1] sm:$0x1]
    %v48 = vperm.slane %v46, 0
    %v50 = vmul.f32 %v45, %v48
    %v51 = vld [vmem:[%s2] sm:$0x1]
    %v53 = vperm.slane %v51, 0
    %v55 = vadd.f32 %v50, %v53
    %56 = vst.msk [vmem:[#allocation2] sm:$0x3] %vm16, %v55
    // Predicated region
    $region14: #{vision_transformer_forward.7} parent=1 // pred_check
      _
    $region15: #{vision_transformer_forward.7} parent=1 // pred_check_branch
      %58 = sbr.rel (0) target = $region17
    $region16: #{vision_transformer_forward.7} parent=1 // pred_region
      %60 = vsyncadd [#allocation3], 0
      %s62 = sshll.u32 [#allocation2], 4
      %s63 = int_to_ptr.vmem [resolvable:$true] %s62
      %s64 = sshll.u32 %s3, 4
      %s65 = int_to_ptr.hbm [resolvable:$true] %s64
      %67 = dma.vmem_to_hbm [thread:$0]  %s63, 32, %s65, [#allocation3]
    $region17: #{vision_transformer_forward.7} parent=1 // pred_fallthru
      _
    // Predicated region
    $region18: #{vision_transformer_forward.7} parent=1 // pred_check
      _
    $region19: #{vision_transformer_forward.7} parent=1 // pred_check_branch
      %69 = sbr.rel (0) target = $region21
    $region20: #{vision_transformer_forward.7} parent=1 // pred_region
      %71 = dma.done [#allocation3], 32
    $region21: #{vision_transformer_forward.7} parent=1 // pred_fallthru
      _
    %72 = vsyncpa [#allocation3], 1

// kernel: vision_transformer_forward.6
$region0: #{vision_transformer_forward.6}
  #allocation0 [shape = 'u32[]', space=smem, size = 0x4, offset = 0x4, fixed_abs, tag = 'smem constant byte address 0x4 - core index']
  #allocation1 [shape = 'u32[72,128]{1,0:T(1,128)}', space=vmem, size = 0x9000, scoped, tag = 'internal scratch']
  #allocation2 [shape = 'bf16[17,96]{1,0:T(8,128)(2,1)}', space=vmem, size = 0x1800, scoped, tag = 'scratch operand']
  #allocation3 [shape = 'bf16[17,32]{1,0:T(8,128)(2,1)}', space=vmem, size = 0x1800, scoped, tag = 'scratch operand']
  %s0 = inlined_call_operand.vmem [shape: f32[2,17,32], index: 0, kind: input, shape index: {}, may-alias: {0,13}]
  %s1 = inlined_call_operand.vmem [shape: f32[2,1,32], index: 1, kind: input, shape index: {}]
  %s2 = inlined_call_operand.vmem [shape: f32[2,1,32], index: 2, kind: input, shape index: {}]
  %s3 = inlined_call_operand.vmem [shape: bf16[2,32,96], index: 3, kind: input, shape index: {}]
  %s4 = inlined_call_operand.vmem [shape: f32[2,1,96], index: 4, kind: input, shape index: {}]
  %s5 = inlined_call_operand.vmem [shape: bf16[2,32,32], index: 5, kind: input, shape index: {}]
  %s6 = inlined_call_operand.vmem [shape: f32[2,1,32], index: 6, kind: input, shape index: {}]
  %s7 = inlined_call_operand.vmem [shape: f32[2,1,32], index: 7, kind: input, shape index: {}]
  %s8 = inlined_call_operand.vmem [shape: f32[2,1,32], index: 8, kind: input, shape index: {}]
  %s9 = inlined_call_operand.vmem [shape: bf16[2,32,128], index: 9, kind: input, shape index: {}]
  %s10 = inlined_call_operand.vmem [shape: f32[2,1,128], index: 10, kind: input, shape index: {}]
  %s11 = inlined_call_operand.vmem [shape: bf16[2,128,32], index: 11, kind: input, shape index: {}]
  %s12 = inlined_call_operand.vmem [shape: f32[2,1,32], index: 12, kind: input, shape index: {}]
  %s13 = inlined_call_operand.vmem [shape: f32[2,17,32], index: 13, kind: output, shape index: {}, may-alias: {0,13}]
  %s14 = sld [smem:[#allocation0]]
  $region89: #{vision_transformer_forward.6} parent=0
    _
  %s16 = ssub.s32 1, %s14
  %s17 = scalar_select 0, %s16, %s14
  loop: start=0, step=1, limit=6
  $region2: #{vision_transformer_forward.6} parent=0 // loop_pre_header
    _
  $region3: #{vision_transformer_forward.6} parent=0 // loop_header
    %s19 = sphi 0, %s23
    %p20 = scmp.ge.s32.totalorder %s19, 6
    %s26 = sphi 0, %s38
    %s27 = sphi 0, %s34
    %s28 = sphi 0, %s26
    %s29 = sphi 0, %s27
    %s30 = sphi 0, %s28
    %s31 = sphi 0, %s29
    %s41 = sphi 0, %s43
    %s44 = sphi 0, %s41
    %s45 = sphi 0, %s44
    %s61 = sphi 0, %s45
    %s67 = sphi 0, %s69
    %s70 = sphi 0, %s67
    %s71 = sphi 0, %s70
    %s87 = sphi 0, %s71
    %s93 = sphi 0, %s95
    %s96 = sphi 0, %s93
    %s97 = sphi 0, %s96
    %s113 = sphi 0, %s97
    %s119 = sphi 0, %s121
    %s122 = sphi 0, %s119
    %s123 = sphi 0, %s122
    %s139 = sphi 0, %s123
    %s145 = sphi 0, %s147
    %s148 = sphi 0, %s145
    %s149 = sphi 0, %s148
    %s165 = sphi 0, %s149
    %s171 = sphi 0, %s173
    %s174 = sphi 0, %s171
    %s175 = sphi 0, %s174
    %s191 = sphi 0, %s175
    %s197 = sphi 0, %s199
    %s200 = sphi 0, %s197
    %s201 = sphi 0, %s200
    %s217 = sphi 0, %s201
    %s223 = sphi 0, %s225
    %s226 = sphi 0, %s223
    %s227 = sphi 0, %s226
    %s243 = sphi 0, %s227
    %s249 = sphi 0, %s251
    %s252 = sphi 0, %s249
    %s253 = sphi 0, %s252
    %s269 = sphi 0, %s253
    %s275 = sphi 0, %s277
    %s278 = sphi 0, %s275
    %s279 = sphi 0, %s278
    %s295 = sphi 0, %s279
    %s301 = sphi 0, %s303
    %s304 = sphi 0, %s301
    %s305 = sphi 0, %s304
    %s321 = sphi 0, %s305
    %s327 = sphi 0, %s329
    %s330 = sphi 0, %s327
    %s331 = sphi 0, %s330
    %s347 = sphi 0, %s331
    %s353 = sphi 0, %s355
    %s356 = sphi 0, %s353
    %s357 = sphi 0, %s356
    %s373 = sphi 0, %s357
    %s379 = sphi 0, %s381
    %s382 = sphi 0, %s379
    %s383 = sphi 0, %s382
    %s399 = sphi 0, %s383
  $region4: #{vision_transformer_forward.6} parent=0 // loop_header_branch
    %22 = sbr.rel (%p20) target = $region8
  $region5: #{vision_transformer_forward.6} parent=0 // loop_body
    %s24 = ssub.s32 %s19, 1
    %s25 = ssub.s32 %s19, 2
    %s32 = sadd.s32 1, %s27
    %p33 = scmp.ge.s32.totalorder %s32, 2
    %s34 = scalar_select %p33, 0, %s32
    %s35 = sadd.s32 1, %s26
    %s36 = scalar_select %p33, %s35, %s26
    %p37 = scmp.ge.s32.totalorder %s36, 2
    %s38 = scalar_select %p37, 0, %s36
    %s39 = ssub.s32 %s26, %s38
    %p40 = scmp.eq.s32.totalorder %s39, 0
    %s42 = sadd.s32 %s41, 1
    %s43 = scalar_select %p40, %s41, %s42
    %p46 = pneg %p40
    %p47 = scmp.eq.s32.totalorder %s19, 3
    %p48 = por %p46, %p47
    %p49 = scmp.ne.s32.totalorder %s41, %s44
    %p50 = scmp.eq.s32.totalorder %s19, 0
    %p51 = por %p49, %p50
    %p52 = scmp.ne.s32.totalorder %s41, %s44
    %p53 = scmp.eq.s32.totalorder %s24, 3
    %p54 = por %p52, %p53
    %p55 = scmp.ne.s32.totalorder %s44, %s45
    %p56 = scmp.eq.s32.totalorder %s24, 0
    %p57 = por %p55, %p56
    %p58 = scmp.ne.s32.totalorder %s44, %s45
    %p59 = scmp.eq.s32.totalorder %s25, 3
    %p60 = por %p58, %p59
    %p62 = scmp.ne.s32.totalorder %s45, %s61
    %p63 = scmp.eq.s32.totalorder %s25, 0
    %p64 = por %p62, %p63
    %s65 = ssub.s32 %s27, %s34
    %p66 = scmp.eq.s32.totalorder %s65, 0
    %s68 = sadd.s32 %s67, 1
    %s69 = scalar_select %p66, %s67, %s68
    %p72 = pneg %p66
    %p73 = scmp.eq.s32.totalorder %s19, 3
    %p74 = por %p72, %p73
    %p75 = scmp.ne.s32.totalorder %s67, %s70
    %p76 = scmp.eq.s32.totalorder %s19, 0
    %p77 = por %p75, %p76
    %p78 = scmp.ne.s32.totalorder %s67, %s70
    %p79 = scmp.eq.s32.totalorder %s24, 3
    %p80 = por %p78, %p79
    %p81 = scmp.ne.s32.totalorder %s70, %s71
    %p82 = scmp.eq.s32.totalorder %s24, 0
    %p83 = por %p81, %p82
    %p84 = scmp.ne.s32.totalorder %s70, %s71
    %p85 = scmp.eq.s32.totalorder %s25, 3
    %p86 = por %p84, %p85
    %p88 = scmp.ne.s32.totalorder %s71, %s87
    %p89 = scmp.eq.s32.totalorder %s25, 0
    %p90 = por %p88, %p89
    %s91 = ssub.s32 %s27, %s34
    %p92 = scmp.eq.s32.totalorder %s91, 0
    %s94 = sadd.s32 %s93, 1
    %s95 = scalar_select %p92, %s93, %s94
    %p98 = pneg %p92
    %p99 = scmp.eq.s32.totalorder %s19, 3
    %p100 = por %p98, %p99
    %p101 = scmp.ne.s32.totalorder %s93, %s96
    %p102 = scmp.eq.s32.totalorder %s19, 0
    %p103 = por %p101, %p102
    %p104 = scmp.ne.s32.totalorder %s93, %s96
    %p105 = scmp.eq.s32.totalorder %s24, 3
    %p106 = por %p104, %p105
    %p107 = scmp.ne.s32.totalorder %s96, %s97
    %p108 = scmp.eq.s32.totalorder %s24, 0
    %p109 = por %p107, %p108
    %p110 = scmp.ne.s32.totalorder %s96, %s97
    %p111 = scmp.eq.s32.totalorder %s25, 3
    %p112 = por %p110, %p111
    %p114 = scmp.ne.s32.totalorder %s97, %s113
    %p115 = scmp.eq.s32.totalorder %s25, 0
    %p116 = por %p114, %p115
    %s117 = ssub.s32 %s27, %s34
    %p118 = scmp.eq.s32.totalorder %s117, 0
    %s120 = sadd.s32 %s119, 1
    %s121 = scalar_select %p118, %s119, %s120
    %p124 = pneg %p118
    %p125 = scmp.eq.s32.totalorder %s19, 3
    %p126 = por %p124, %p125
    %p127 = scmp.ne.s32.totalorder %s119, %s122
    %p128 = scmp.eq.s32.totalorder %s19, 0
    %p129 = por %p127, %p128
    %p130 = scmp.ne.s32.totalorder %s119, %s122
    %p131 = scmp.eq.s32.totalorder %s24, 3
    %p132 = por %p130, %p131
    %p133 = scmp.ne.s32.totalorder %s122, %s123
    %p134 = scmp.eq.s32.totalorder %s24, 0
    %p135 = por %p133, %p134
    %p136 = scmp.ne.s32.totalorder %s122, %s123
    %p137 = scmp.eq.s32.totalorder %s25, 3
    %p138 = por %p136, %p137
    %p140 = scmp.ne.s32.totalorder %s123, %s139
    %p141 = scmp.eq.s32.totalorder %s25, 0
    %p142 = por %p140, %p141
    %s143 = ssub.s32 %s27, %s34
    %p144 = scmp.eq.s32.totalorder %s143, 0
    %s146 = sadd.s32 %s145, 1
    %s147 = scalar_select %p144, %s145, %s146
    %p150 = pneg %p144
    %p151 = scmp.eq.s32.totalorder %s19, 3
    %p152 = por %p150, %p151
    %p153 = scmp.ne.s32.totalorder %s145, %s148
    %p154 = scmp.eq.s32.totalorder %s19, 0
    %p155 = por %p153, %p154
    %p156 = scmp.ne.s32.totalorder %s145, %s148
    %p157 = scmp.eq.s32.totalorder %s24, 3
    %p158 = por %p156, %p157
    %p159 = scmp.ne.s32.totalorder %s148, %s149
    %p160 = scmp.eq.s32.totalorder %s24, 0
    %p161 = por %p159, %p160
    %p162 = scmp.ne.s32.totalorder %s148, %s149
    %p163 = scmp.eq.s32.totalorder %s25, 3
    %p164 = por %p162, %p163
    %p166 = scmp.ne.s32.totalorder %s149, %s165
    %p167 = scmp.eq.s32.totalorder %s25, 0
    %p168 = por %p166, %p167
    %s169 = ssub.s32 %s27, %s34
    %p170 = scmp.eq.s32.totalorder %s169, 0
    %s172 = sadd.s32 %s171, 1
    %s173 = scalar_select %p170, %s171, %s172
    %p176 = pneg %p170
    %p177 = scmp.eq.s32.totalorder %s19, 3
    %p178 = por %p176, %p177
    %p179 = scmp.ne.s32.totalorder %s171, %s174
    %p180 = scmp.eq.s32.totalorder %s19, 0
    %p181 = por %p179, %p180
    %p182 = scmp.ne.s32.totalorder %s171, %s174
    %p183 = scmp.eq.s32.totalorder %s24, 3
    %p184 = por %p182, %p183
    %p185 = scmp.ne.s32.totalorder %s174, %s175
    %p186 = scmp.eq.s32.totalorder %s24, 0
    %p187 = por %p185, %p186
    %p188 = scmp.ne.s32.totalorder %s174, %s175
    %p189 = scmp.eq.s32.totalorder %s25, 3
    %p190 = por %p188, %p189
    %p192 = scmp.ne.s32.totalorder %s175, %s191
    %p193 = scmp.eq.s32.totalorder %s25, 0
    %p194 = por %p192, %p193
    %s195 = ssub.s32 %s27, %s34
    %p196 = scmp.eq.s32.totalorder %s195, 0
    %s198 = sadd.s32 %s197, 1
    %s199 = scalar_select %p196, %s197, %s198
    %p202 = pneg %p196
    %p203 = scmp.eq.s32.totalorder %s19, 3
    %p204 = por %p202, %p203
    %p205 = scmp.ne.s32.totalorder %s197, %s200
    %p206 = scmp.eq.s32.totalorder %s19, 0
    %p207 = por %p205, %p206
    %p208 = scmp.ne.s32.totalorder %s197, %s200
    %p209 = scmp.eq.s32.totalorder %s24, 3
    %p210 = por %p208, %p209
    %p211 = scmp.ne.s32.totalorder %s200, %s201
    %p212 = scmp.eq.s32.totalorder %s24, 0
    %p213 = por %p211, %p212
    %p214 = scmp.ne.s32.totalorder %s200, %s201
    %p215 = scmp.eq.s32.totalorder %s25, 3
    %p216 = por %p214, %p215
    %p218 = scmp.ne.s32.totalorder %s201, %s217
    %p219 = scmp.eq.s32.totalorder %s25, 0
    %p220 = por %p218, %p219
    %s221 = ssub.s32 %s27, %s34
    %p222 = scmp.eq.s32.totalorder %s221, 0
    %s224 = sadd.s32 %s223, 1
    %s225 = scalar_select %p222, %s223, %s224
    %p228 = pneg %p222
    %p229 = scmp.eq.s32.totalorder %s19, 3
    %p230 = por %p228, %p229
    %p231 = scmp.ne.s32.totalorder %s223, %s226
    %p232 = scmp.eq.s32.totalorder %s19, 0
    %p233 = por %p231, %p232
    %p234 = scmp.ne.s32.totalorder %s223, %s226
    %p235 = scmp.eq.s32.totalorder %s24, 3
    %p236 = por %p234, %p235
    %p237 = scmp.ne.s32.totalorder %s226, %s227
    %p238 = scmp.eq.s32.totalorder %s24, 0
    %p239 = por %p237, %p238
    %p240 = scmp.ne.s32.totalorder %s226, %s227
    %p241 = scmp.eq.s32.totalorder %s25, 3
    %p242 = por %p240, %p241
    %p244 = scmp.ne.s32.totalorder %s227, %s243
    %p245 = scmp.eq.s32.totalorder %s25, 0
    %p246 = por %p244, %p245
    %s247 = ssub.s32 %s27, %s34
    %p248 = scmp.eq.s32.totalorder %s247, 0
    %s250 = sadd.s32 %s249, 1
    %s251 = scalar_select %p248, %s249, %s250
    %p254 = pneg %p248
    %p255 = scmp.eq.s32.totalorder %s19, 3
    %p256 = por %p254, %p255
    %p257 = scmp.ne.s32.totalorder %s249, %s252
    %p258 = scmp.eq.s32.totalorder %s19, 0
    %p259 = por %p257, %p258
    %p260 = scmp.ne.s32.totalorder %s249, %s252
    %p261 = scmp.eq.s32.totalorder %s24, 3
    %p262 = por %p260, %p261
    %p263 = scmp.ne.s32.totalorder %s252, %s253
    %p264 = scmp.eq.s32.totalorder %s24, 0
    %p265 = por %p263, %p264
    %p266 = scmp.ne.s32.totalorder %s252, %s253
    %p267 = scmp.eq.s32.totalorder %s25, 3
    %p268 = por %p266, %p267
    %p270 = scmp.ne.s32.totalorder %s253, %s269
    %p271 = scmp.eq.s32.totalorder %s25, 0
    %p272 = por %p270, %p271
    %s273 = ssub.s32 %s27, %s34
    %p274 = scmp.eq.s32.totalorder %s273, 0
    %s276 = sadd.s32 %s275, 1
    %s277 = scalar_select %p274, %s275, %s276
    %p280 = pneg %p274
    %p281 = scmp.eq.s32.totalorder %s19, 3
    %p282 = por %p280, %p281
    %p283 = scmp.ne.s32.totalorder %s275, %s278
    %p284 = scmp.eq.s32.totalorder %s19, 0
    %p285 = por %p283, %p284
    %p286 = scmp.ne.s32.totalorder %s275, %s278
    %p287 = scmp.eq.s32.totalorder %s24, 3
    %p288 = por %p286, %p287
    %p289 = scmp.ne.s32.totalorder %s278, %s279
    %p290 = scmp.eq.s32.totalorder %s24, 0
    %p291 = por %p289, %p290
    %p292 = scmp.ne.s32.totalorder %s278, %s279
    %p293 = scmp.eq.s32.totalorder %s25, 3
    %p294 = por %p292, %p293
    %p296 = scmp.ne.s32.totalorder %s279, %s295
    %p297 = scmp.eq.s32.totalorder %s25, 0
    %p298 = por %p296, %p297
    %s299 = ssub.s32 %s27, %s34
    %p300 = scmp.eq.s32.totalorder %s299, 0
    %s302 = sadd.s32 %s301, 1
    %s303 = scalar_select %p300, %s301, %s302
    %p306 = pneg %p300
    %p307 = scmp.eq.s32.totalorder %s19, 3
    %p308 = por %p306, %p307
    %p309 = scmp.ne.s32.totalorder %s301, %s304
    %p310 = scmp.eq.s32.totalorder %s19, 0
    %p311 = por %p309, %p310
    %p312 = scmp.ne.s32.totalorder %s301, %s304
    %p313 = scmp.eq.s32.totalorder %s24, 3
    %p314 = por %p312, %p313
    %p315 = scmp.ne.s32.totalorder %s304, %s305
    %p316 = scmp.eq.s32.totalorder %s24, 0
    %p317 = por %p315, %p316
    %p318 = scmp.ne.s32.totalorder %s304, %s305
    %p319 = scmp.eq.s32.totalorder %s25, 3
    %p320 = por %p318, %p319
    %p322 = scmp.ne.s32.totalorder %s305, %s321
    %p323 = scmp.eq.s32.totalorder %s25, 0
    %p324 = por %p322, %p323
    %s325 = ssub.s32 %s27, %s34
    %p326 = scmp.eq.s32.totalorder %s325, 0
    %s328 = sadd.s32 %s327, 1
    %s329 = scalar_select %p326, %s327, %s328
    %p332 = pneg %p326
    %p333 = scmp.eq.s32.totalorder %s19, 3
    %p334 = por %p332, %p333
    %p335 = scmp.ne.s32.totalorder %s327, %s330
    %p336 = scmp.eq.s32.totalorder %s19, 0
    %p337 = por %p335, %p336
    %p338 = scmp.ne.s32.totalorder %s327, %s330
    %p339 = scmp.eq.s32.totalorder %s24, 3
    %p340 = por %p338, %p339
    %p341 = scmp.ne.s32.totalorder %s330, %s331
    %p342 = scmp.eq.s32.totalorder %s24, 0
    %p343 = por %p341, %p342
    %p344 = scmp.ne.s32.totalorder %s330, %s331
    %p345 = scmp.eq.s32.totalorder %s25, 3
    %p346 = por %p344, %p345
    %p348 = scmp.ne.s32.totalorder %s331, %s347
    %p349 = scmp.eq.s32.totalorder %s25, 0
    %p350 = por %p348, %p349
    %s351 = ssub.s32 %s27, %s34
    %p352 = scmp.eq.s32.totalorder %s351, 0
    %s354 = sadd.s32 %s353, 1
    %s355 = scalar_select %p352, %s353, %s354
    %p358 = pneg %p352
    %p359 = scmp.eq.s32.totalorder %s19, 3
    %p360 = por %p358, %p359
    %p361 = scmp.ne.s32.totalorder %s353, %s356
    %p362 = scmp.eq.s32.totalorder %s19, 0
    %p363 = por %p361, %p362
    %p364 = scmp.ne.s32.totalorder %s353, %s356
    %p365 = scmp.eq.s32.totalorder %s24, 3
    %p366 = por %p364, %p365
    %p367 = scmp.ne.s32.totalorder %s356, %s357
    %p368 = scmp.eq.s32.totalorder %s24, 0
    %p369 = por %p367, %p368
    %p370 = scmp.ne.s32.totalorder %s356, %s357
    %p371 = scmp.eq.s32.totalorder %s25, 3
    %p372 = por %p370, %p371
    %p374 = scmp.ne.s32.totalorder %s357, %s373
    %p375 = scmp.eq.s32.totalorder %s25, 0
    %p376 = por %p374, %p375
    %s377 = ssub.s32 %s26, %s38
    %p378 = scmp.eq.s32.totalorder %s377, 0
    %s380 = sadd.s32 %s379, 1
    %s381 = scalar_select %p378, %s379, %s380
    %p384 = pneg %p378
    %p385 = scmp.eq.s32.totalorder %s19, 3
    %p386 = por %p384, %p385
    %p387 = scmp.ne.s32.totalorder %s379, %s382
    %p388 = scmp.eq.s32.totalorder %s19, 0
    %p389 = por %p387, %p388
    %p390 = scmp.ne.s32.totalorder %s379, %s382
    %p391 = scmp.eq.s32.totalorder %s24, 3
    %p392 = por %p390, %p391
    %p393 = scmp.ne.s32.totalorder %s382, %s383
    %p394 = scmp.eq.s32.totalorder %s24, 0
    %p395 = por %p393, %p394
    %p396 = scmp.ne.s32.totalorder %s382, %s383
    %p397 = scmp.eq.s32.totalorder %s25, 3
    %p398 = por %p396, %p397
    %p400 = scmp.ne.s32.totalorder %s383, %s399
    %p401 = scmp.eq.s32.totalorder %s25, 0
    %p402 = por %p400, %p401
    %p403 = scmp.le.s32.totalorder 1, %s19
    %p404 = scmp.lt.s32.totalorder %s19, 5
    %p405 = pnand %p403, %p404
    %p406 = pneg %p405
    // Predicated region
    $region9: #{vision_transformer_forward.6} parent=5 // pred_check
      _
    $region10: #{vision_transformer_forward.6} parent=5 // pred_check_branch
      %408 = sbr.rel (%p405) target = $region12
    $region11: #{vision_transformer_forward.6} parent=5 // pred_region
      %s409 = ssub.s32 %s19, 1
    $region12: #{vision_transformer_forward.6} parent=5 // pred_fallthru
      _
    %p410 = scmp.lt.s32.totalorder %s19, 4
    // Predicated region
    $region13: #{vision_transformer_forward.6} parent=5 // pred_check
      %p411 = pneg %p410
    $region14: #{vision_transformer_forward.6} parent=5 // pred_check_branch
      %413 = sbr.rel (%p411) target = $region16
    $region15: #{vision_transformer_forward.6} parent=5 // pred_region
      // Predicated region
      $region17: #{vision_transformer_forward.6} parent=15 // pred_check
        %p414 = pneg %p51
      $region18: #{vision_transformer_forward.6} parent=15 // pred_check_branch
        %416 = sbr.rel (%p414) target = $region20
      $region19: #{vision_transformer_forward.6} parent=15 // pred_region
        %p417 = scmp.lt.s32.totalorder %s26, 1
        %s418 = scalar_select %p417, %s26, 1
        %s419 = smul.addr %s418, 3
        %s420 = smul.addr %s419, 8
        %s421 = scalar_lea.vmem %s0, %s420
      $region20: #{vision_transformer_forward.6} parent=15 // pred_fallthru
        _
      // Predicated region
      $region21: #{vision_transformer_forward.6} parent=15 // pred_check
        %p422 = pneg %p77
      $region22: #{vision_transformer_forward.6} parent=15 // pred_check_branch
        %424 = sbr.rel (%p422) target = $region24
      $region23: #{vision_transformer_forward.6} parent=15 // pred_region
        %p425 = scmp.lt.s32.totalorder %s27, 1
        %s426 = scalar_select %p425, %s27, 1
        %s427 = scalar_lea.vmem %s1, %s426
      $region24: #{vision_transformer_forward.6} parent=15 // pred_fallthru
        _
      // Predicated region
      $region25: #{vision_transformer_forward.6} parent=15 // pred_check
        %p428 = pneg %p103
      $region26: #{vision_transformer_forward.6} parent=15 // pred_check_branch
        %430 = sbr.rel (%p428) target = $region28
      $region27: #{vision_transformer_forward.6} parent=15 // pred_region
        %p431 = scmp.lt.s32.totalorder %s27, 1
        %s432 = scalar_select %p431, %s27, 1
        %s433 = scalar_lea.vmem %s2, %s432
      $region28: #{vision_transformer_forward.6} parent=15 // pred_fallthru
        _
      // Predicated region
      $region29: #{vision_transformer_forward.6} parent=15 // pred_check
        %p434 = pneg %p129
      $region30: #{vision_transformer_forward.6} parent=15 // pred_check_branch
        %436 = sbr.rel (%p434) target = $region32
      $region31: #{vision_transformer_forward.6} parent=15 // pred_region
        %p437 = scmp.lt.s32.totalorder %s27, 1
        %s438 = scalar_select %p437, %s27, 1
        %s439 = smul.addr %s438, 4
        %s440 = smul.addr %s439, 4
        %s441 = scalar_lea.vmem %s3, %s440
      $region32: #{vision_transformer_forward.6} parent=15 // pred_fallthru
        _
      // Predicated region
      $region33: #{vision_transformer_forward.6} parent=15 // pred_check
        %p442 = pneg %p155
      $region34: #{vision_transformer_forward.6} parent=15 // pred_check_branch
        %444 = sbr.rel (%p442) target = $region36
      $region35: #{vision_transformer_forward.6} parent=15 // pred_region
        %p445 = scmp.lt.s32.totalorder %s27, 1
        %s446 = scalar_select %p445, %s27, 1
        %s447 = scalar_lea.vmem %s4, %s446
      $region36: #{vision_transformer_forward.6} parent=15 // pred_fallthru
        _
      // Predicated region
      $region37: #{vision_transformer_forward.6} parent=15 // pred_check
        %p448 = pneg %p181
      $region38: #{vision_transformer_forward.6} parent=15 // pred_check_branch
        %450 = sbr.rel (%p448) target = $region40
      $region39: #{vision_transformer_forward.6} parent=15 // pred_region
        %p451 = scmp.lt.s32.totalorder %s27, 1
        %s452 = scalar_select %p451, %s27, 1
        %s453 = smul.addr %s452, 4
        %s454 = smul.addr %s453, 4
        %s455 = scalar_lea.vmem %s5, %s454
      $region40: #{vision_transformer_forward.6} parent=15 // pred_fallthru
        _
      // Predicated region
      $region41: #{vision_transformer_forward.6} parent=15 // pred_check
        %p456 = pneg %p207
      $region42: #{vision_transformer_forward.6} parent=15 // pred_check_branch
        %458 = sbr.rel (%p456) target = $region44
      $region43: #{vision_transformer_forward.6} parent=15 // pred_region
        %p459 = scmp.lt.s32.totalorder %s27, 1
        %s460 = scalar_select %p459, %s27, 1
        %s461 = scalar_lea.vmem %s6, %s460
      $region44: #{vision_transformer_forward.6} parent=15 // pred_fallthru
        _
      // Predicated region
      $region45: #{vision_transformer_forward.6} parent=15 // pred_check
        %p462 = pneg %p233
      $region46: #{vision_transformer_forward.6} parent=15 // pred_check_branch
        %464 = sbr.rel (%p462) target = $region48
      $region47: #{vision_transformer_forward.6} parent=15 // pred_region
        %p465 = scmp.lt.s32.totalorder %s27, 1
        %s466 = scalar_select %p465, %s27, 1
        %s467 = scalar_lea.vmem %s7, %s466
      $region48: #{vision_transformer_forward.6} parent=15 // pred_fallthru
        _
      // Predicated region
      $region49: #{vision_transformer_forward.6} parent=15 // pred_check
        %p468 = pneg %p259
      $region50: #{vision_transformer_forward.6} parent=15 // pred_check_branch
        %470 = sbr.rel (%p468) target = $region52
      $region51: #{vision_transformer_forward.6} parent=15 // pred_region
        %p471 = scmp.lt.s32.totalorder %s27, 1
        %s472 = scalar_select %p471, %s27, 1
        %s473 = scalar_lea.vmem %s8, %s472
      $region52: #{vision_transformer_forward.6} parent=15 // pred_fallthru
        _
      // Predicated region
      $region53: #{vision_transformer_forward.6} parent=15 // pred_check
        %p474 = pneg %p285
      $region54: #{vision_transformer_forward.6} parent=15 // pred_check_branch
        %476 = sbr.rel (%p474) target = $region56
      $region55: #{vision_transformer_forward.6} parent=15 // pred_region
        %p477 = scmp.lt.s32.totalorder %s27, 1
        %s478 = scalar_select %p477, %s27, 1
        %s479 = smul.addr %s478, 4
        %s480 = smul.addr %s479, 4
        %s481 = scalar_lea.vmem %s9, %s480
      $region56: #{vision_transformer_forward.6} parent=15 // pred_fallthru
        _
      // Predicated region
      $region57: #{vision_transformer_forward.6} parent=15 // pred_check
        %p482 = pneg %p311
      $region58: #{vision_transformer_forward.6} parent=15 // pred_check_branch
        %484 = sbr.rel (%p482) target = $region60
      $region59: #{vision_transformer_forward.6} parent=15 // pred_region
        %p485 = scmp.lt.s32.totalorder %s27, 1
        %s486 = scalar_select %p485, %s27, 1
        %s487 = scalar_lea.vmem %s10, %s486
      $region60: #{vision_transformer_forward.6} parent=15 // pred_fallthru
        _
      // Predicated region
      $region61: #{vision_transformer_forward.6} parent=15 // pred_check
        %p488 = pneg %p337
      $region62: #{vision_transformer_forward.6} parent=15 // pred_check_branch
        %490 = sbr.rel (%p488) target = $region64
      $region63: #{vision_transformer_forward.6} parent=15 // pred_region
        %p491 = scmp.lt.s32.totalorder %s27, 1
        %s492 = scalar_select %p491, %s27, 1
        %s493 = smul.addr %s492, 16
        %s494 = smul.addr %s493, 4
        %s495 = scalar_lea.vmem %s11, %s494
      $region64: #{vision_transformer_forward.6} parent=15 // pred_fallthru
        _
      // Predicated region
      $region65: #{vision_transformer_forward.6} parent=15 // pred_check
        %p496 = pneg %p363
      $region66: #{vision_transformer_forward.6} parent=15 // pred_check_branch
        %498 = sbr.rel (%p496) target = $region68
      $region67: #{vision_transformer_forward.6} parent=15 // pred_region
        %p499 = scmp.lt.s32.totalorder %s27, 1
        %s500 = scalar_select %p499, %s27, 1
        %s501 = scalar_lea.vmem %s12, %s500
      $region68: #{vision_transformer_forward.6} parent=15 // pred_fallthru
        _
    $region16: #{vision_transformer_forward.6} parent=5 // pred_fallthru
      _
    %p502 = scmp.le.s32.totalorder 1, %s19
    %p503 = scmp.lt.s32.totalorder %s19, 5
    %p504 = pnand %p502, %p503
    %p505 = pneg %p504
    // Predicated region
    $region69: #{vision_transformer_forward.6} parent=5 // pred_check
      _
    $region70: #{vision_transformer_forward.6} parent=5 // pred_check_branch
      %507 = sbr.rel (%p504) target = $region72
    $region71: #{vision_transformer_forward.6} parent=5 // pred_region
      %s508 = ssub.s32 %s19, 1
      %p509 = scmp.lt.s32.totalorder %s28, 1
      %s510 = scalar_select %p509, %s28, 1
      %s511 = smul.addr %s510, 3
      %s512 = smul.addr %s511, 8
      %s513 = scalar_lea.vmem %s0, %s512
      %p514 = pneg %p57
      %p515 = pneg %p54
      %p516 = scmp.lt.s32.totalorder %s29, 1
      %s517 = scalar_select %p516, %s29, 1
      %s518 = scalar_lea.vmem %s1, %s517
      %p519 = pneg %p83
      %p520 = pneg %p80
      %p521 = scmp.lt.s32.totalorder %s29, 1
      %s522 = scalar_select %p521, %s29, 1
      %s523 = scalar_lea.vmem %s2, %s522
      %p524 = pneg %p109
      %p525 = pneg %p106
      %p526 = scmp.lt.s32.totalorder %s29, 1
      %s527 = scalar_select %p526, %s29, 1
      %s528 = smul.addr %s527, 4
      %s529 = smul.addr %s528, 4
      %s530 = scalar_lea.vmem %s3, %s529
      %p531 = pneg %p135
      %p532 = pneg %p132
      %p533 = scmp.lt.s32.totalorder %s29, 1
      %s534 = scalar_select %p533, %s29, 1
      %s535 = scalar_lea.vmem %s4, %s534
      %p536 = pneg %p161
      %p537 = pneg %p158
      %p538 = scmp.lt.s32.totalorder %s29, 1
      %s539 = scalar_select %p538, %s29, 1
      %s540 = smul.addr %s539, 4
      %s541 = smul.addr %s540, 4
      %s542 = scalar_lea.vmem %s5, %s541
      %p543 = pneg %p187
      %p544 = pneg %p184
      %p545 = scmp.lt.s32.totalorder %s29, 1
      %s546 = scalar_select %p545, %s29, 1
      %s547 = scalar_lea.vmem %s6, %s546
      %p548 = pneg %p213
      %p549 = pneg %p210
      %p550 = scmp.lt.s32.totalorder %s29, 1
      %s551 = scalar_select %p550, %s29, 1
      %s552 = scalar_lea.vmem %s7, %s551
      %p553 = pneg %p239
      %p554 = pneg %p236
      %p555 = scmp.lt.s32.totalorder %s29, 1
      %s556 = scalar_select %p555, %s29, 1
      %s557 = scalar_lea.vmem %s8, %s556
      %p558 = pneg %p265
      %p559 = pneg %p262
      %p560 = scmp.lt.s32.totalorder %s29, 1
      %s561 = scalar_select %p560, %s29, 1
      %s562 = smul.addr %s561, 4
      %s563 = smul.addr %s562, 4
      %s564 = scalar_lea.vmem %s9, %s563
      %p565 = pneg %p291
      %p566 = pneg %p288
      %p567 = scmp.lt.s32.totalorder %s29, 1
      %s568 = scalar_select %p567, %s29, 1
      %s569 = scalar_lea.vmem %s10, %s568
      %p570 = pneg %p317
      %p571 = pneg %p314
      %p572 = scmp.lt.s32.totalorder %s29, 1
      %s573 = scalar_select %p572, %s29, 1
      %s574 = smul.addr %s573, 16
      %s575 = smul.addr %s574, 4
      %s576 = scalar_lea.vmem %s11, %s575
      %p577 = pneg %p343
      %p578 = pneg %p340
      %p579 = scmp.lt.s32.totalorder %s29, 1
      %s580 = scalar_select %p579, %s29, 1
      %s581 = scalar_lea.vmem %s12, %s580
      %p582 = pneg %p369
      %p583 = pneg %p366
      %p584 = pneg %p395
      %p585 = pneg %p392
      %p586 = scmp.lt.s32.totalorder %s28, 1
      %s587 = scalar_select %p586, %s28, 1
      %s588 = smul.addr %s587, 3
      %s589 = smul.addr %s588, 8
      %s590 = scalar_lea.vmem %s13, %s589
      %p591 = scmp.lt.s32.totalorder %s28, 1
      %s592 = scalar_select %p591, %s28, 1
      %s593 = smul.addr %s592, 3
      %s594 = smul.addr %s593, 8
      %s595 = scalar_lea.vmem %s0, %s594
      %p596 = scmp.lt.s32.totalorder %s29, 1
      %s597 = scalar_select %p596, %s29, 1
      %s598 = scalar_lea.vmem %s1, %s597
      %p599 = scmp.lt.s32.totalorder %s29, 1
      %s600 = scalar_select %p599, %s29, 1
      %s601 = scalar_lea.vmem %s2, %s600
      %p602 = scmp.lt.s32.totalorder %s29, 1
      %s603 = scalar_select %p602, %s29, 1
      %s604 = smul.addr %s603, 4
      %s605 = smul.addr %s604, 4
      %s606 = scalar_lea.vmem %s3, %s605
      %p607 = scmp.lt.s32.totalorder %s29, 1
      %s608 = scalar_select %p607, %s29, 1
      %s609 = scalar_lea.vmem %s4, %s608
      %p610 = scmp.lt.s32.totalorder %s29, 1
      %s611 = scalar_select %p610, %s29, 1
      %s612 = smul.addr %s611, 4
      %s613 = smul.addr %s612, 4
      %s614 = scalar_lea.vmem %s5, %s613
      %p615 = scmp.lt.s32.totalorder %s29, 1
      %s616 = scalar_select %p615, %s29, 1
      %s617 = scalar_lea.vmem %s6, %s616
      %p618 = scmp.lt.s32.totalorder %s29, 1
      %s619 = scalar_select %p618, %s29, 1
      %s620 = scalar_lea.vmem %s7, %s619
      %p621 = scmp.lt.s32.totalorder %s29, 1
      %s622 = scalar_select %p621, %s29, 1
      %s623 = scalar_lea.vmem %s8, %s622
      %p624 = scmp.lt.s32.totalorder %s29, 1
      %s625 = scalar_select %p624, %s29, 1
      %s626 = smul.addr %s625, 4
      %s627 = smul.addr %s626, 4
      %s628 = scalar_lea.vmem %s9, %s627
      %p629 = scmp.lt.s32.totalorder %s29, 1
      %s630 = scalar_select %p629, %s29, 1
      %s631 = scalar_lea.vmem %s10, %s630
      %p632 = scmp.lt.s32.totalorder %s29, 1
      %s633 = scalar_select %p632, %s29, 1
      %s634 = smul.addr %s633, 16
      %s635 = smul.addr %s634, 4
      %s636 = scalar_lea.vmem %s11, %s635
      %p637 = scmp.lt.s32.totalorder %s29, 1
      %s638 = scalar_select %p637, %s29, 1
      %s639 = scalar_lea.vmem %s12, %s638
      %p640 = scmp.lt.s32.totalorder %s28, 1
      %s641 = scalar_select %p640, %s28, 1
      %s642 = smul.addr %s641, 3
      %s643 = smul.addr %s642, 8
      %s644 = scalar_lea.vmem %s13, %s643
      %p646 = scmp.eq.s32.totalorder %s29, 0
      // Predicated region
      $region73: #{vision_transformer_forward.6} parent=71 // pred_check
        %p647 = pneg %p646
      $region74: #{vision_transformer_forward.6} parent=71 // pred_check_branch
        %649 = sbr.rel (%p647) target = $region76
      $region75: #{vision_transformer_forward.6} parent=71 // pred_region
        %v650 = vld [vmem:[%s595] sm:$0xff]
        %v651 = vld [vmem:[%s595 + $0x8] sm:$0xff]
        %v652 = vld [vmem:[%s595 + $0x10] sm:$0x1]
        %vm653 = vcmask 261120
        %654 = vst.msk [vmem:[%s644] sm:$0xff] %vm653, %v650
        %655 = vst.msk [vmem:[%s644 + $0x8] sm:$0xff] %vm653, %v651
        %vm656 = vcmask 253952
        %657 = vst.msk [vmem:[%s644 + $0x10] sm:$0x1] %vm656, %v652
      $region76: #{vision_transformer_forward.6} parent=71 // pred_fallthru
        _
      %v658 = vld [vmem:[%s644] sm:$0xff]
      %v659 = vld [vmem:[%s644 + $0x8] sm:$0xff]
      %v660 = vld [vmem:[%s644 + $0x10] sm:$0x1]
      %v661 = vld [vmem:[%s598] sm:$0x1]
      %v662 = vld [vmem:[%s601] sm:$0x1]
      %vm663 = vcmask 261120
      %v664 = vsel %vm663, %v658, 0.0
      %665 = vadd.xlane.f32.xlu0 %v664
      %v666 = vpop.xlane.xlu0 %665
      %v667 = vsel %vm663, %v659, 0.0
      %668 = vadd.xlane.f32.xlu0 %v667
      %v669 = vpop.xlane.xlu0 %668
      %vm670 = vcmask 253952
      %v671 = vsel %vm670, %v660, 0.0
      %672 = vadd.xlane.f32.xlu0 %v671
      %v673 = vpop.xlane.xlu0 %672
      %v674 = vrcp.pop 32.0
      %v675 = vmul.f32 32.0, %v674
      %v676 = vsub.f32 1.0, %v675
      %v677 = vmul.f32 %v674, %v676
      %v678 = vadd.f32 %v674, %v677
      %vm679 = vweird.f32 %v674
      %v680 = vsel %vm679, %v674, %v678
      %v681 = vmul.f32 %v666, %v680
      %v682 = vmul.f32 %v669, %v680
      %v683 = vmul.f32 %v673, %v680
      %v684 = vsub.f32 %v658, %v681
      %v685 = vsub.f32 %v659, %v682
      %v686 = vsub.f32 %v660, %v683
      %v687 = vmul.f32 %v684, %v684
      %v688 = vmul.f32 %v685, %v685
      %v689 = vmul.f32 %v686, %v686
      %v690 = vsel %vm663, %v687, 0.0
      %691 = vadd.xlane.f32.xlu0 %v690
      %v692 = vpop.xlane.xlu0 %691
      %v693 = vsel %vm663, %v688, 0.0
      %694 = vadd.xlane.f32.xlu0 %v693
      %v695 = vpop.xlane.xlu0 %694
      %v696 = vsel %vm670, %v689, 0.0
      %697 = vadd.xlane.f32.xlu0 %v696
      %v698 = vpop.xlane.xlu0 %697
      %v699 = vmul.f32 %v692, %v680
      %v700 = vmul.f32 %v695, %v680
      %v701 = vmul.f32 %v698, %v680
      %v702 = vadd.f32 %v699, 1e-05
      %v703 = vadd.f32 %v700, 1e-05
      %v704 = vadd.f32 %v701, 1e-05
      %v705 = vrsqrt.pop %v702
      %v706 = vmul.f32 %v705, %v702
      %v707 = vmul.f32 %v706, %v705
      %v708 = vmul.f32 0.5, %v707
      %v709 = vsub.f32 1.5, %v708
      %v710 = vmul.f32 %v705, %v709
      %vm711 = vweird.f32 %v702
      %vm712 = vweird.f32 %v705
      %vm713 = vmor %vm711, %vm712
      %v714 = vsel %vm713, %v705, %v710
      %v715 = vrsqrt.pop %v703
      %v716 = vmul.f32 %v715, %v703
      %v717 = vmul.f32 %v716, %v715
      %v718 = vmul.f32 0.5, %v717
      %v719 = vsub.f32 1.5, %v718
      %v720 = vmul.f32 %v715, %v719
      %vm721 = vweird.f32 %v703
      %vm722 = vweird.f32 %v715
      %vm723 = vmor %vm721, %vm722
      %v724 = vsel %vm723, %v715, %v720
      %v725 = vrsqrt.pop %v704
      %v726 = vmul.f32 %v725, %v704
      %v727 = vmul.f32 %v726, %v725
      %v728 = vmul.f32 0.5, %v727
      %v729 = vsub.f32 1.5, %v728
      %v730 = vmul.f32 %v725, %v729
      %vm731 = vweird.f32 %v704
      %vm732 = vweird.f32 %v725
      %vm733 = vmor %vm731, %vm732
      %v734 = vsel %vm733, %v725, %v730
      %v735 = vmul.f32 %v684, %v714
      %v736 = vmul.f32 %v685, %v724
      %v737 = vmul.f32 %v686, %v734
      %v739 = vperm.slane %v661, 0
      %v741 = vmul.f32 %v735, %v739
      %v742 = vmul.f32 %v736, %v739
      %v743 = vmul.f32 %v737, %v739
      %v745 = vperm.slane %v662, 0
      %v747 = vadd.f32 %v741, %v745
      %v748 = vadd.f32 %v742, %v745
      %v749 = vadd.f32 %v743, %v745
      %v750 = vpack.c.bf16 %v748, %v747
      %v751 = vpack.c.bf16 %v749, %v749
      %v752 = vld [vmem:[%s606] sm:$0xf]
      %v753 = vld [vmem:[%s606 + $0x4] sm:$0xf]
      %v754 = vld [vmem:[%s606 + $0x8] sm:$0xf]
      %v755 = vld [vmem:[%s606 + $0xc] sm:$0xf]
      %v756 = vld [vmem:[%s609] sm:$0x1]
      %v758 = vperm.slane %v756, 0
      %v764 = vunpack.c.l.b16 %v752
      %v765 = vunpack.c.l.b16 %v753
      %v766 = vunpack.c.l.b16 %v754
      %v767 = vunpack.c.l.b16 %v755
      %v768 = vpack.c.b16 %v765, %v764
      %v769 = vpack.c.b16 %v767, %v766
      %v773 = vsel %vm663, %v750, 0
      %v776 = vsel %vm663, %v751, 0
      %778 = vmatpush.bf16.msra.mxu0 0
      %779 = vmatpush.bf16.msra.mxu0 0
      %780 = vmatpush.bf16.msra.mxu0 0
      %781 = vmatpush.bf16.msra.mxu0 0
      %782 = vmatpush.bf16.msra.mxu0 0
      %783 = vmatpush.bf16.msra.mxu0 0
      %784 = vmatpush.bf16.msra.mxu0 %v769
      %785 = vmatpush.bf16.msra.mxu0 %v768
      %786 = vmatmul.bf16.gmra.mxu0 %v773
      %v787 = vpop.f32.mrf.mxu0
      %v788 = vadd.f32 %v758, %v787
      %v789 = vpop.f32.mrf.mxu0
      %v790 = vadd.f32 %v758, %v789
      %791 = vmatmul.bf16.gmra.mxu0 %v776
      %v792 = vpop.f32.mrf.mxu0
      %v793 = vadd.f32 %v758, %v792
      %v794 = vpop.f32.mrf.mxu0
      %795 = vdwg.mxu0
      %v796 = vpack.c.bf16 %v788, %v788
      %v797 = vpack.c.bf16 %v790, %v790
      %v798 = vpack.c.bf16 %v793, %v793
      %vm799 = vcmask 781312
      %800 = vst.msk [vmem:[#allocation2] sm:$0xf] %vm799, %v796
      %801 = vst.msk [vmem:[#allocation2 + $0x4] sm:$0xf] %vm799, %v797
      %vm802 = vcmask 778240
      %vm803 = vsmask.f32 256
      %vm804 = vmand %vm802, %vm803
      %v805 = vld [vmem:[#allocation2 + $0x8] sm:$0x1]
      %v806 = vsel %vm804, %v798, %v805
      %807 = vst [vmem:[#allocation2 + $0x8] sm:$0x1] %v806
      %v808 = vld [vmem:[#allocation2] sm:$0xf]
      %v809 = vld [vmem:[#allocation2 + $0x4] sm:$0xf]
      %v810 = vld [vmem:[#allocation2 + $0x8] sm:$0x1]
      %v814 = vunpack.c.l.b16 %v808
      %v815 = vunpack.c.l.b16 %v809
      %v816 = vunpack.c.l.b16 %v810
      %v817 = vpack.c.b16 %v815, %v814
      %v818 = vpack.c.b16 %v816, %v816
      %819 = vrot.lane.b32.xlu0 %v817, 96
      %v820 = vpop.permute.xlu0 %819
      %821 = vrot.lane.b32.xlu0 %v818, 96
      %v822 = vpop.permute.xlu0 %821
      %vm823 = vcmask 64512
      %v825 = vsel %vm823, %v817, 0
      %v828 = vsel %vm823, %v818, 0
      %v831 = vsel %vm823, %v820, 0
      %v834 = vsel %vm823, %v822, 0
      %836 = vmatpush.bf16.xpose.msra.mxu0 0
      %837 = vmatpush.bf16.xpose.msra.mxu0 0
      %838 = vmatpush.bf16.xpose.msra.mxu0 0
      %839 = vmatpush.bf16.xpose.msra.mxu0 0
      %840 = vmatpush.bf16.xpose.msra.mxu0 0
      %841 = vmatpush.bf16.xpose.msra.mxu0 0
      %842 = vmatpush.bf16.xpose.msra.mxu0 %v834
      %843 = vmatpush.bf16.xpose.msra.mxu0 %v831
      %844 = vmatmul.bf16.gmra.mxu0 %v825
      %v845 = vpop.f32.mrf.mxu0
      %v846 = vadd.f32 0.0, %v845
      %v847 = vpop.f32.mrf.mxu0
      %v848 = vadd.f32 0.0, %v847
      %849 = vmatmul.bf16.gmra.mxu0 %v828
      %v850 = vpop.f32.mrf.mxu0
      %v851 = vadd.f32 0.0, %v850
      %v852 = vpop.f32.mrf.mxu0
      %853 = vdwg.mxu0
      %vm854 = vcmask 138240
      %v855 = vsel %vm854, %v846, -inf
      %856 = vmax.xlane.f32.xlu0 %v855
      %v857 = vpop.xlane.xlu0 %856
      %v858 = vsel %vm854, %v848, -inf
      %859 = vmax.xlane.f32.xlu0 %v858
      %v860 = vpop.xlane.xlu0 %859
      %vm861 = vcmask 131072
      %v862 = vsel %vm861, %v851, -inf
      %863 = vmax.xlane.f32.xlu0 %v862
      %v864 = vpop.xlane.xlu0 %863
      %v865 = vsub.f32 %v846, %v857
      %v866 = vsub.f32 %v848, %v860
      %v867 = vsub.f32 %v851, %v864
      %v868 = vmul.f32 %v865, 1.442695
      %v869 = vpow.pop %v868
      %v870 = vmul.f32 %v866, 1.442695
      %v871 = vpow.pop %v870
      %v872 = vmul.f32 %v867, 1.442695
      %v873 = vpow.pop %v872
      %v874 = vsel %vm854, %v869, 0.0
      %875 = vadd.xlane.f32.xlu0 %v874
      %v876 = vpop.xlane.xlu0 %875
      %v877 = vsel %vm854, %v871, 0.0
      %878 = vadd.xlane.f32.xlu0 %v877
      %v879 = vpop.xlane.xlu0 %878
      %v880 = vsel %vm861, %v873, 0.0
      %881 = vadd.xlane.f32.xlu0 %v880
      %v882 = vpop.xlane.xlu0 %881
      %v883 = vrcp.pop %v876
      %v884 = vrcp.pop %v879
      %v885 = vrcp.pop %v882
      %v886 = vmul.f32 %v869, %v883
      %v887 = vmul.f32 %v871, %v884
      %v888 = vmul.f32 %v873, %v885
      %v889 = vpack.c.bf16 %v887, %v886
      %v890 = vpack.c.bf16 %v888, %v888
      %891 = vrot.lane.b32.xlu0 %v817, 64
      %v892 = vpop.permute.xlu0 %891
      %893 = vrot.lane.b32.xlu0 %v818, 64
      %v894 = vpop.permute.xlu0 %893
      %v897 = vsel %vm854, %v889, 0
      %v900 = vsel %vm854, %v890, 0
      %vm902 = vcmask 1040384
      %v903 = vsel 0, 4294967295, 65535
      %v904 = vsel %vm902, %v903, 0
      %v906 = vand.u32 %v894, %v904
      %908 = vmatpush.bf16.msra.mxu0 0
      %909 = vmatpush.bf16.msra.mxu0 0
      %910 = vmatpush.bf16.msra.mxu0 0
      %911 = vmatpush.bf16.msra.mxu0 0
      %912 = vmatpush.bf16.msra.mxu0 0
      %913 = vmatpush.bf16.msra.mxu0 0
      %914 = vmatpush.bf16.msra.mxu0 %v906
      %915 = vmatpush.bf16.msra.mxu0 %v892
      %916 = vmatmul.bf16.gmra.mxu0 %v897
      %v917 = vpop.f32.mrf.mxu0
      %v918 = vadd.f32 0.0, %v917
      %v919 = vpop.f32.mrf.mxu0
      %v920 = vadd.f32 0.0, %v919
      %921 = vmatmul.bf16.gmra.mxu0 %v900
      %v922 = vpop.f32.mrf.mxu0
      %v923 = vadd.f32 0.0, %v922
      %v924 = vpop.f32.mrf.mxu0
      %925 = vdwg.mxu0
      %v926 = vpack.c.bf16 %v918, %v918
      %v927 = vpack.c.bf16 %v920, %v920
      %v928 = vpack.c.bf16 %v923, %v923
      %vm929 = vcmask 60416
      %930 = vst.msk [vmem:[#allocation3] sm:$0xf] %vm929, %v926
      %931 = vst.msk [vmem:[#allocation3 + $0x4] sm:$0xf] %vm929, %v927
      %vm932 = vcmask 57344
      %vm933 = vmand %vm932, %vm803
      %v934 = vld [vmem:[#allocation3 + $0x8] sm:$0x1]
      %v935 = vsel %vm933, %v928, %v934
      %936 = vst [vmem:[#allocation3 + $0x8] sm:$0x1] %v935
      %v937 = vld [vmem:[#allocation2] sm:$0xf]
      %v938 = vld [vmem:[#allocation2 + $0x4] sm:$0xf]
      %v939 = vld [vmem:[#allocation2 + $0x8] sm:$0x1]
      %v943 = vunpack.c.l.b16 %v937
      %v944 = vunpack.c.l.b16 %v938
      %v945 = vunpack.c.l.b16 %v939
      %v946 = vpack.c.b16 %v944, %v943
      %v947 = vpack.c.b16 %v945, %v945
      %948 = vrot.lane.b32.xlu0 %v946, 120
      %v949 = vpop.permute.xlu0 %948
      %950 = vrot.lane.b32.xlu0 %v947, 120
      %v951 = vpop.permute.xlu0 %950
      %952 = vrot.lane.b32.xlu0 %v946, 88
      %v953 = vpop.permute.xlu0 %952
      %954 = vrot.lane.b32.xlu0 %v947, 88
      %v955 = vpop.permute.xlu0 %954
      %v957 = vsel %vm823, %v949, 0
      %v960 = vsel %vm823, %v951, 0
      %v963 = vsel %vm823, %v953, 0
      %v966 = vsel %vm823, %v955, 0
      %968 = vmatpush.bf16.xpose.msra.mxu0 0
      %969 = vmatpush.bf16.xpose.msra.mxu0 0
      %970 = vmatpush.bf16.xpose.msra.mxu0 0
      %971 = vmatpush.bf16.xpose.msra.mxu0 0
      %972 = vmatpush.bf16.xpose.msra.mxu0 0
      %973 = vmatpush.bf16.xpose.msra.mxu0 0
      %974 = vmatpush.bf16.xpose.msra.mxu0 %v966
      %975 = vmatpush.bf16.xpose.msra.mxu0 %v963
      %976 = vmatmul.bf16.gmra.mxu0 %v957
      %v977 = vpop.f32.mrf.mxu0
      %v978 = vadd.f32 0.0, %v977
      %v979 = vpop.f32.mrf.mxu0
      %v980 = vadd.f32 0.0, %v979
      %981 = vmatmul.bf16.gmra.mxu0 %v960
      %v982 = vpop.f32.mrf.mxu0
      %v983 = vadd.f32 0.0, %v982
      %v984 = vpop.f32.mrf.mxu0
      %985 = vdwg.mxu0
      %v986 = vsel %vm854, %v978, -inf
      %987 = vmax.xlane.f32.xlu0 %v986
      %v988 = vpop.xlane.xlu0 %987
      %v989 = vsel %vm854, %v980, -inf
      %990 = vmax.xlane.f32.xlu0 %v989
      %v991 = vpop.xlane.xlu0 %990
      %v992 = vsel %vm861, %v983, -inf
      %993 = vmax.xlane.f32.xlu0 %v992
      %v994 = vpop.xlane.xlu0 %993
      %v995 = vsub.f32 %v978, %v988
      %v996 = vsub.f32 %v980, %v991
      %v997 = vsub.f32 %v983, %v994
      %v998 = vmul.f32 %v995, 1.442695
      %v999 = vpow.pop %v998
      %v1000 = vmul.f32 %v996, 1.442695
      %v1001 = vpow.pop %v1000
      %v1002 = vmul.f32 %v997, 1.442695
      %v1003 = vpow.pop %v1002
      %v1004 = vsel %vm854, %v999, 0.0
      %1005 = vadd.xlane.f32.xlu0 %v1004
      %v1006 = vpop.xlane.xlu0 %1005
      %v1007 = vsel %vm854, %v1001, 0.0
      %1008 = vadd.xlane.f32.xlu0 %v1007
      %v1009 = vpop.xlane.xlu0 %1008
      %v1010 = vsel %vm861, %v1003, 0.0
      %1011 = vadd.xlane.f32.xlu0 %v1010
      %v1012 = vpop.xlane.xlu0 %1011
      %v1013 = vrcp.pop %v1006
      %v1014 = vrcp.pop %v1009
      %v1015 = vrcp.pop %v1012
      %v1016 = vmul.f32 %v999, %v1013
      %v1017 = vmul.f32 %v1001, %v1014
      %v1018 = vmul.f32 %v1003, %v1015
      %v1019 = vpack.c.bf16 %v1017, %v1016
      %v1020 = vpack.c.bf16 %v1018, %v1018
      %1021 = vrot.lane.b32.xlu0 %v946, 56
      %v1022 = vpop.permute.xlu0 %1021
      %1023 = vrot.lane.b32.xlu0 %v947, 56
      %v1024 = vpop.permute.xlu0 %1023
      %v1027 = vsel %vm854, %v1019, 0
      %v1030 = vsel %vm854, %v1020, 0
      %v1033 = vand.u32 %v1024, %v904
      %1035 = vmatpush.bf16.msra.mxu0 0
      %1036 = vmatpush.bf16.msra.mxu0 0
      %1037 = vmatpush.bf16.msra.mxu0 0
      %1038 = vmatpush.bf16.msra.mxu0 0
      %1039 = vmatpush.bf16.msra.mxu0 0
      %1040 = vmatpush.bf16.msra.mxu0 0
      %1041 = vmatpush.bf16.msra.mxu0 %v1033
      %1042 = vmatpush.bf16.msra.mxu0 %v1022
      %1043 = vmatmul.bf16.gmra.mxu0 %v1027
      %v1044 = vpop.f32.mrf.mxu0
      %v1045 = vadd.f32 0.0, %v1044
      %v1046 = vpop.f32.mrf.mxu0
      %v1047 = vadd.f32 0.0, %v1046
      %1048 = vmatmul.bf16.gmra.mxu0 %v1030
      %v1049 = vpop.f32.mrf.mxu0
      %v1050 = vadd.f32 0.0, %v1049
      %v1051 = vpop.f32.mrf.mxu0
      %1052 = vdwg.mxu0
      %v1053 = vpack.c.bf16 %v1045, %v1045
      %v1054 = vpack.c.bf16 %v1047, %v1047
      %v1055 = vpack.c.bf16 %v1050, %v1050
      %1059 = vrot.lane.b32.xlu0 %v1053, 8
      %v1060 = vpop.permute.xlu0 %1059
      %1061 = vrot.lane.b32.xlu0 %v1054, 8
      %v1062 = vpop.permute.xlu0 %1061
      %1063 = vrot.lane.b32.xlu0 %v1055, 8
      %v1064 = vpop.permute.xlu0 %1063
      %vm1068 = vcmask 126016
      %1069 = vst.msk [vmem:[#allocation3] sm:$0xf] %vm1068, %v1060
      %1070 = vst.msk [vmem:[#allocation3 + $0x4] sm:$0xf] %vm1068, %v1062
      %vm1071 = vcmask 122944
      %vm1072 = vmand %vm1071, %vm803
      %v1073 = vld [vmem:[#allocation3 + $0x8] sm:$0x1]
      %v1074 = vsel %vm1072, %v1064, %v1073
      %1075 = vst [vmem:[#allocation3 + $0x8] sm:$0x1] %v1074
      %v1076 = vld [vmem:[#allocation2] sm:$0xf]
      %v1077 = vld [vmem:[#allocation2 + $0x4] sm:$0xf]
      %v1078 = vld [vmem:[#allocation2 + $0x8] sm:$0x1]
      %v1082 = vunpack.c.l.b16 %v1076
      %v1083 = vunpack.c.l.b16 %v1077
      %v1084 = vunpack.c.l.b16 %v1078
      %v1085 = vpack.c.b16 %v1083, %v1082
      %v1086 = vpack.c.b16 %v1084, %v1084
      %1087 = vrot.lane.b32.xlu0 %v1085, 112
      %v1088 = vpop.permute.xlu0 %1087
      %1089 = vrot.lane.b32.xlu0 %v1086, 112
      %v1090 = vpop.permute.xlu0 %1089
      %1091 = vrot.lane.b32.xlu0 %v1085, 80
      %v1092 = vpop.permute.xlu0 %1091
      %1093 = vrot.lane.b32.xlu0 %v1086, 80
      %v1094 = vpop.permute.xlu0 %1093
      %v1096 = vsel %vm823, %v1088, 0
      %v1099 = vsel %vm823, %v1090, 0
      %v1102 = vsel %vm823, %v1092, 0
      %v1105 = vsel %vm823, %v1094, 0
      %1107 = vmatpush.bf16.xpose.msra.mxu0 0
      %1108 = vmatpush.bf16.xpose.msra.mxu0 0
      %1109 = vmatpush.bf16.xpose.msra.mxu0 0
      %1110 = vmatpush.bf16.xpose.msra.mxu0 0
      %1111 = vmatpush.bf16.xpose.msra.mxu0 0
      %1112 = vmatpush.bf16.xpose.msra.mxu0 0
      %1113 = vmatpush.bf16.xpose.msra.mxu0 %v1105
      %1114 = vmatpush.bf16.xpose.msra.mxu0 %v1102
      %1115 = vmatmul.bf16.gmra.mxu0 %v1096
      %v1116 = vpop.f32.mrf.mxu0
      %v1117 = vadd.f32 0.0, %v1116
      %v1118 = vpop.f32.mrf.mxu0
      %v1119 = vadd.f32 0.0, %v1118
      %1120 = vmatmul.bf16.gmra.mxu0 %v1099
      %v1121 = vpop.f32.mrf.mxu0
      %v1122 = vadd.f32 0.0, %v1121
      %v1123 = vpop.f32.mrf.mxu0
      %1124 = vdwg.mxu0
      %v1125 = vsel %vm854, %v1117, -inf
      %1126 = vmax.xlane.f32.xlu0 %v1125
      %v1127 = vpop.xlane.xlu0 %1126
      %v1128 = vsel %vm854, %v1119, -inf
      %1129 = vmax.xlane.f32.xlu0 %v1128
      %v1130 = vpop.xlane.xlu0 %1129
      %v1131 = vsel %vm861, %v1122, -inf
      %1132 = vmax.xlane.f32.xlu0 %v1131
      %v1133 = vpop.xlane.xlu0 %1132
      %v1134 = vsub.f32 %v1117, %v1127
      %v1135 = vsub.f32 %v1119, %v1130
      %v1136 = vsub.f32 %v1122, %v1133
      %v1137 = vmul.f32 %v1134, 1.442695
      %v1138 = vpow.pop %v1137
      %v1139 = vmul.f32 %v1135, 1.442695
      %v1140 = vpow.pop %v1139
      %v1141 = vmul.f32 %v1136, 1.442695
      %v1142 = vpow.pop %v1141
      %v1143 = vsel %vm854, %v1138, 0.0
      %1144 = vadd.xlane.f32.xlu0 %v1143
      %v1145 = vpop.xlane.xlu0 %1144
      %v1146 = vsel %vm854, %v1140, 0.0
      %1147 = vadd.xlane.f32.xlu0 %v1146
      %v1148 = vpop.xlane.xlu0 %1147
      %v1149 = vsel %vm861, %v1142, 0.0
      %1150 = vadd.xlane.f32.xlu0 %v1149
      %v1151 = vpop.xlane.xlu0 %1150
      %v1152 = vrcp.pop %v1145
      %v1153 = vrcp.pop %v1148
      %v1154 = vrcp.pop %v1151
      %v1155 = vmul.f32 %v1138, %v1152
      %v1156 = vmul.f32 %v1140, %v1153
      %v1157 = vmul.f32 %v1142, %v1154
      %v1158 = vpack.c.bf16 %v1156, %v1155
      %v1159 = vpack.c.bf16 %v1157, %v1157
      %1160 = vrot.lane.b32.xlu0 %v1085, 48
      %v1161 = vpop.permute.xlu0 %1160
      %1162 = vrot.lane.b32.xlu0 %v1086, 48
      %v1163 = vpop.permute.xlu0 %1162
      %v1166 = vsel %vm854, %v1158, 0
      %v1169 = vsel %vm854, %v1159, 0
      %v1172 = vand.u32 %v1163, %v904
      %1174 = vmatpush.bf16.msra.mxu0 0
      %1175 = vmatpush.bf16.msra.mxu0 0
      %1176 = vmatpush.bf16.msra.mxu0 0
      %1177 = vmatpush.bf16.msra.mxu0 0
      %1178 = vmatpush.bf16.msra.mxu0 0
      %1179 = vmatpush.bf16.msra.mxu0 0
      %1180 = vmatpush.bf16.msra.mxu0 %v1172
      %1181 = vmatpush.bf16.msra.mxu0 %v1161
      %1182 = vmatmul.bf16.gmra.mxu0 %v1166
      %v1183 = vpop.f32.mrf.mxu0
      %v1184 = vadd.f32 0.0, %v1183
      %v1185 = vpop.f32.mrf.mxu0
      %v1186 = vadd.f32 0.0, %v1185
      %1187 = vmatmul.bf16.gmra.mxu0 %v1169
      %v1188 = vpop.f32.mrf.mxu0
      %v1189 = vadd.f32 0.0, %v1188
      %v1190 = vpop.f32.mrf.mxu0
      %1191 = vdwg.mxu0
      %v1192 = vpack.c.bf16 %v1184, %v1184
      %v1193 = vpack.c.bf16 %v1186, %v1186
      %v1194 = vpack.c.bf16 %v1189, %v1189
      %1198 = vrot.lane.b32.xlu0 %v1192, 16
      %v1199 = vpop.permute.xlu0 %1198
      %1200 = vrot.lane.b32.xlu0 %v1193, 16
      %v1201 = vpop.permute.xlu0 %1200
      %1202 = vrot.lane.b32.xlu0 %v1194, 16
      %v1203 = vpop.permute.xlu0 %1202
      %vm1207 = vcmask 191616
      %1208 = vst.msk [vmem:[#allocation3] sm:$0xf] %vm1207, %v1199
      %1209 = vst.msk [vmem:[#allocation3 + $0x4] sm:$0xf] %vm1207, %v1201
      %vm1210 = vcmask 188544
      %vm1211 = vmand %vm1210, %vm803
      %v1212 = vld [vmem:[#allocation3 + $0x8] sm:$0x1]
      %v1213 = vsel %vm1211, %v1203, %v1212
      %1214 = vst [vmem:[#allocation3 + $0x8] sm:$0x1] %v1213
      %v1215 = vld [vmem:[#allocation2] sm:$0xf]
      %v1216 = vld [vmem:[#allocation2 + $0x4] sm:$0xf]
      %v1217 = vld [vmem:[#allocation2 + $0x8] sm:$0x1]
      %v1221 = vunpack.c.l.b16 %v1215
      %v1222 = vunpack.c.l.b16 %v1216
      %v1223 = vunpack.c.l.b16 %v1217
      %v1224 = vpack.c.b16 %v1222, %v1221
      %v1225 = vpack.c.b16 %v1223, %v1223
      %1226 = vrot.lane.b32.xlu0 %v1224, 104
      %v1227 = vpop.permute.xlu0 %1226
      %1228 = vrot.lane.b32.xlu0 %v1225, 104
      %v1229 = vpop.permute.xlu0 %1228
      %1230 = vrot.lane.b32.xlu0 %v1224, 72
      %v1231 = vpop.permute.xlu0 %1230
      %1232 = vrot.lane.b32.xlu0 %v1225, 72
      %v1233 = vpop.permute.xlu0 %1232
      %v1235 = vsel %vm823, %v1227, 0
      %v1238 = vsel %vm823, %v1229, 0
      %v1241 = vsel %vm823, %v1231, 0
      %v1244 = vsel %vm823, %v1233, 0
      %1246 = vmatpush.bf16.xpose.msra.mxu0 0
      %1247 = vmatpush.bf16.xpose.msra.mxu0 0
      %1248 = vmatpush.bf16.xpose.msra.mxu0 0
      %1249 = vmatpush.bf16.xpose.msra.mxu0 0
      %1250 = vmatpush.bf16.xpose.msra.mxu0 0
      %1251 = vmatpush.bf16.xpose.msra.mxu0 0
      %1252 = vmatpush.bf16.xpose.msra.mxu0 %v1244
      %1253 = vmatpush.bf16.xpose.msra.mxu0 %v1241
      %1254 = vmatmul.bf16.gmra.mxu0 %v1235
      %v1255 = vpop.f32.mrf.mxu0
      %v1256 = vadd.f32 0.0, %v1255
      %v1257 = vpop.f32.mrf.mxu0
      %v1258 = vadd.f32 0.0, %v1257
      %1259 = vmatmul.bf16.gmra.mxu0 %v1238
      %v1260 = vpop.f32.mrf.mxu0
      %v1261 = vadd.f32 0.0, %v1260
      %v1262 = vpop.f32.mrf.mxu0
      %1263 = vdwg.mxu0
      %v1264 = vsel %vm854, %v1256, -inf
      %1265 = vmax.xlane.f32.xlu0 %v1264
      %v1266 = vpop.xlane.xlu0 %1265
      %v1267 = vsel %vm854, %v1258, -inf
      %1268 = vmax.xlane.f32.xlu0 %v1267
      %v1269 = vpop.xlane.xlu0 %1268
      %v1270 = vsel %vm861, %v1261, -inf
      %1271 = vmax.xlane.f32.xlu0 %v1270
      %v1272 = vpop.xlane.xlu0 %1271
      %v1273 = vsub.f32 %v1256, %v1266
      %v1274 = vsub.f32 %v1258, %v1269
      %v1275 = vsub.f32 %v1261, %v1272
      %v1276 = vmul.f32 %v1273, 1.442695
      %v1277 = vpow.pop %v1276
      %v1278 = vmul.f32 %v1274, 1.442695
      %v1279 = vpow.pop %v1278
      %v1280 = vmul.f32 %v1275, 1.442695
      %v1281 = vpow.pop %v1280
      %v1282 = vsel %vm854, %v1277, 0.0
      %1283 = vadd.xlane.f32.xlu0 %v1282
      %v1284 = vpop.xlane.xlu0 %1283
      %v1285 = vsel %vm854, %v1279, 0.0
      %1286 = vadd.xlane.f32.xlu0 %v1285
      %v1287 = vpop.xlane.xlu0 %1286
      %v1288 = vsel %vm861, %v1281, 0.0
      %1289 = vadd.xlane.f32.xlu0 %v1288
      %v1290 = vpop.xlane.xlu0 %1289
      %v1291 = vrcp.pop %v1284
      %v1292 = vrcp.pop %v1287
      %v1293 = vrcp.pop %v1290
      %v1294 = vmul.f32 %v1277, %v1291
      %v1295 = vmul.f32 %v1279, %v1292
      %v1296 = vmul.f32 %v1281, %v1293
      %v1297 = vpack.c.bf16 %v1295, %v1294
      %v1298 = vpack.c.bf16 %v1296, %v1296
      %1299 = vrot.lane.b32.xlu0 %v1224, 40
      %v1300 = vpop.permute.xlu0 %1299
      %1301 = vrot.lane.b32.xlu0 %v1225, 40
      %v1302 = vpop.permute.xlu0 %1301
      %v1305 = vsel %vm854, %v1297, 0
      %v1308 = vsel %vm854, %v1298, 0
      %v1311 = vand.u32 %v1302, %v904
      %1313 = vmatpush.bf16.msra.mxu0 0
      %1314 = vmatpush.bf16.msra.mxu0 0
      %1315 = vmatpush.bf16.msra.mxu0 0
      %1316 = vmatpush.bf16.msra.mxu0 0
      %1317 = vmatpush.bf16.msra.mxu0 0
      %1318 = vmatpush.bf16.msra.mxu0 0
      %1319 = vmatpush.bf16.msra.mxu0 %v1311
      %1320 = vmatpush.bf16.msra.mxu0 %v1300
      %1321 = vmatmul.bf16.gmra.mxu0 %v1305
      %v1322 = vpop.f32.mrf.mxu0
      %v1323 = vadd.f32 0.0, %v1322
      %v1324 = vpop.f32.mrf.mxu0
      %v1325 = vadd.f32 0.0, %v1324
      %1326 = vmatmul.bf16.gmra.mxu0 %v1308
      %v1327 = vpop.f32.mrf.mxu0
      %v1328 = vadd.f32 0.0, %v1327
      %v1329 = vpop.f32.mrf.mxu0
      %1330 = vdwg.mxu0
      %v1331 = vpack.c.bf16 %v1323, %v1323
      %v1332 = vpack.c.bf16 %v1325, %v1325
      %v1333 = vpack.c.bf16 %v1328, %v1328
      %1337 = vrot.lane.b32.xlu0 %v1331, 24
      %v1338 = vpop.permute.xlu0 %1337
      %1339 = vrot.lane.b32.xlu0 %v1332, 24
      %v1340 = vpop.permute.xlu0 %1339
      %1341 = vrot.lane.b32.xlu0 %v1333, 24
      %v1342 = vpop.permute.xlu0 %1341
      %vm1346 = vcmask 257216
      %1347 = vst.msk [vmem:[#allocation3] sm:$0xf] %vm1346, %v1338
      %1348 = vst.msk [vmem:[#allocation3 + $0x4] sm:$0xf] %vm1346, %v1340
      %vm1349 = vcmask 254144
      %vm1350 = vmand %vm1349, %vm803
      %v1351 = vld [vmem:[#allocation3 + $0x8] sm:$0x1]
      %v1352 = vsel %vm1350, %v1342, %v1351
      %1353 = vst [vmem:[#allocation3 + $0x8] sm:$0x1] %v1352
      %v1354 = vld [vmem:[#allocation3] sm:$0xf]
      %v1355 = vld [vmem:[#allocation3 + $0x4] sm:$0xf]
      %v1356 = vld [vmem:[#allocation3 + $0x8] sm:$0x1]
      %v1357 = vld [vmem:[%s614] sm:$0xf]
      %v1358 = vld [vmem:[%s614 + $0x4] sm:$0xf]
      %v1359 = vld [vmem:[%s614 + $0x8] sm:$0xf]
      %v1360 = vld [vmem:[%s614 + $0xc] sm:$0xf]
      %v1361 = vld [vmem:[%s617] sm:$0x1]
      %v1363 = vperm.slane %v1361, 0
      %v1368 = vunpack.c.l.b16 %v1354
      %v1369 = vunpack.c.l.b16 %v1355
      %v1370 = vunpack.c.l.b16 %v1356
      %v1371 = vpack.c.b16 %v1369, %v1368
      %v1372 = vpack.c.b16 %v1370, %v1370
      %v1377 = vunpack.c.l.b16 %v1357
      %v1378 = vunpack.c.l.b16 %v1358
      %v1379 = vunpack.c.l.b16 %v1359
      %v1380 = vunpack.c.l.b16 %v1360
      %v1381 = vpack.c.b16 %v1378, %v1377
      %v1382 = vpack.c.b16 %v1380, %v1379
      %v1386 = vsel %vm663, %v1371, 0
      %v1389 = vsel %vm663, %v1372, 0
      %1391 = vmatpush.bf16.msra.mxu0 0
      %1392 = vmatpush.bf16.msra.mxu0 0
      %1393 = vmatpush.bf16.msra.mxu0 0
      %1394 = vmatpush.bf16.msra.mxu0 0
      %1395 = vmatpush.bf16.msra.mxu0 0
      %1396 = vmatpush.bf16.msra.mxu0 0
      %1397 = vmatpush.bf16.msra.mxu0 %v1382
      %1398 = vmatpush.bf16.msra.mxu0 %v1381
      %1399 = vmatmul.bf16.gmra.mxu0 %v1386
      %v1400 = vpop.f32.mrf.mxu0
      %v1401 = vadd.f32 %v1363, %v1400
      %v1402 = vpop.f32.mrf.mxu0
      %v1403 = vadd.f32 %v1363, %v1402
      %1404 = vmatmul.bf16.gmra.mxu0 %v1389
      %v1405 = vpop.f32.mrf.mxu0
      %v1406 = vadd.f32 %v1363, %v1405
      %v1407 = vpop.f32.mrf.mxu0
      %1408 = vdwg.mxu0
      %v1409 = vadd.f32 %v658, %v1401
      %v1410 = vadd.f32 %v659, %v1403
      %v1411 = vadd.f32 %v660, %v1406
      %v1412 = vld [vmem:[%s620] sm:$0x1]
      %v1413 = vld [vmem:[%s623] sm:$0x1]
      %v1414 = vsel %vm663, %v1409, 0.0
      %1415 = vadd.xlane.f32.xlu0 %v1414
      %v1416 = vpop.xlane.xlu0 %1415
      %v1417 = vsel %vm663, %v1410, 0.0
      %1418 = vadd.xlane.f32.xlu0 %v1417
      %v1419 = vpop.xlane.xlu0 %1418
      %v1420 = vsel %vm670, %v1411, 0.0
      %1421 = vadd.xlane.f32.xlu0 %v1420
      %v1422 = vpop.xlane.xlu0 %1421
      %v1423 = vmul.f32 %v1416, %v680
      %v1424 = vmul.f32 %v1419, %v680
      %v1425 = vmul.f32 %v1422, %v680
      %v1426 = vsub.f32 %v1409, %v1423
      %v1427 = vsub.f32 %v1410, %v1424
      %v1428 = vsub.f32 %v1411, %v1425
      %v1429 = vmul.f32 %v1426, %v1426
      %v1430 = vmul.f32 %v1427, %v1427
      %v1431 = vmul.f32 %v1428, %v1428
      %v1432 = vsel %vm663, %v1429, 0.0
      %1433 = vadd.xlane.f32.xlu0 %v1432
      %v1434 = vpop.xlane.xlu0 %1433
      %v1435 = vsel %vm663, %v1430, 0.0
      %1436 = vadd.xlane.f32.xlu0 %v1435
      %v1437 = vpop.xlane.xlu0 %1436
      %v1438 = vsel %vm670, %v1431, 0.0
      %1439 = vadd.xlane.f32.xlu0 %v1438
      %v1440 = vpop.xlane.xlu0 %1439
      %v1441 = vmul.f32 %v1434, %v680
      %v1442 = vmul.f32 %v1437, %v680
      %v1443 = vmul.f32 %v1440, %v680
      %v1444 = vadd.f32 %v1441, 1e-05
      %v1445 = vadd.f32 %v1442, 1e-05
      %v1446 = vadd.f32 %v1443, 1e-05
      %v1447 = vrsqrt.pop %v1444
      %v1448 = vmul.f32 %v1447, %v1444
      %v1449 = vmul.f32 %v1448, %v1447
      %v1450 = vmul.f32 0.5, %v1449
      %v1451 = vsub.f32 1.5, %v1450
      %v1452 = vmul.f32 %v1447, %v1451
      %vm1453 = vweird.f32 %v1444
      %vm1454 = vweird.f32 %v1447
      %vm1455 = vmor %vm1453, %vm1454
      %v1456 = vsel %vm1455, %v1447, %v1452
      %v1457 = vrsqrt.pop %v1445
      %v1458 = vmul.f32 %v1457, %v1445
      %v1459 = vmul.f32 %v1458, %v1457
      %v1460 = vmul.f32 0.5, %v1459
      %v1461 = vsub.f32 1.5, %v1460
      %v1462 = vmul.f32 %v1457, %v1461
      %vm1463 = vweird.f32 %v1445
      %vm1464 = vweird.f32 %v1457
      %vm1465 = vmor %vm1463, %vm1464
      %v1466 = vsel %vm1465, %v1457, %v1462
      %v1467 = vrsqrt.pop %v1446
      %v1468 = vmul.f32 %v1467, %v1446
      %v1469 = vmul.f32 %v1468, %v1467
      %v1470 = vmul.f32 0.5, %v1469
      %v1471 = vsub.f32 1.5, %v1470
      %v1472 = vmul.f32 %v1467, %v1471
      %vm1473 = vweird.f32 %v1446
      %vm1474 = vweird.f32 %v1467
      %vm1475 = vmor %vm1473, %vm1474
      %v1476 = vsel %vm1475, %v1467, %v1472
      %v1477 = vmul.f32 %v1426, %v1456
      %v1478 = vmul.f32 %v1427, %v1466
      %v1479 = vmul.f32 %v1428, %v1476
      %v1481 = vperm.slane %v1412, 0
      %v1483 = vmul.f32 %v1477, %v1481
      %v1484 = vmul.f32 %v1478, %v1481
      %v1485 = vmul.f32 %v1479, %v1481
      %v1487 = vperm.slane %v1413, 0
      %v1489 = vadd.f32 %v1483, %v1487
      %v1490 = vadd.f32 %v1484, %v1487
      %v1491 = vadd.f32 %v1485, %v1487
      %v1492 = vpack.c.bf16 %v1490, %v1489
      %v1493 = vpack.c.bf16 %v1491, %v1491
      %v1494 = vld [vmem:[%s628] sm:$0xf]
      %v1495 = vld [vmem:[%s628 + $0x4] sm:$0xf]
      %v1496 = vld [vmem:[%s628 + $0x8] sm:$0xf]
      %v1497 = vld [vmem:[%s628 + $0xc] sm:$0xf]
      %v1498 = vld [vmem:[%s631] sm:$0x1]
      %v1500 = vperm.slane %v1498, 0
      %v1506 = vunpack.c.l.b16 %v1494
      %v1507 = vunpack.c.l.b16 %v1495
      %v1508 = vunpack.c.l.b16 %v1496
      %v1509 = vunpack.c.l.b16 %v1497
      %v1510 = vpack.c.b16 %v1507, %v1506
      %v1511 = vpack.c.b16 %v1509, %v1508
      %v1515 = vsel %vm663, %v1492, 0
      %v1518 = vsel %vm663, %v1493, 0
      %1520 = vmatpush.bf16.msra.mxu0 0
      %1521 = vmatpush.bf16.msra.mxu0 0
      %1522 = vmatpush.bf16.msra.mxu0 0
      %1523 = vmatpush.bf16.msra.mxu0 0
      %1524 = vmatpush.bf16.msra.mxu0 0
      %1525 = vmatpush.bf16.msra.mxu0 0
      %1526 = vmatpush.bf16.msra.mxu0 %v1511
      %1527 = vmatpush.bf16.msra.mxu0 %v1510
      %1528 = vmatmul.bf16.gmra.mxu0 %v1515
      %v1529 = vpop.f32.mrf.mxu0
      %v1530 = vadd.f32 %v1500, %v1529
      %v1531 = vpop.f32.mrf.mxu0
      %v1532 = vadd.f32 %v1500, %v1531
      %1533 = vmatmul.bf16.gmra.mxu0 %v1518
      %v1534 = vpop.f32.mrf.mxu0
      %v1535 = vadd.f32 %v1500, %v1534
      %v1536 = vpop.f32.mrf.mxu0
      %1537 = vdwg.mxu0
      %v1538 = vmul.f32 %v1530, 1.702
      %v1539 = vmul.f32 %v1532, 1.702
      %v1540 = vmul.f32 %v1535, 1.702
      %v1541 = vxor.u32 %v1538, 2147483648
      %v1542 = vxor.u32 %v1539, 2147483648
      %v1543 = vxor.u32 %v1540, 2147483648
      %v1544 = vmul.f32 %v1541, 1.442695
      %v1545 = vpow.pop %v1544
      %v1546 = vmul.f32 %v1542, 1.442695
      %v1547 = vpow.pop %v1546
      %v1548 = vmul.f32 %v1543, 1.442695
      %v1549 = vpow.pop %v1548
      %v1550 = vadd.f32 %v1545, 1.0
      %v1551 = vadd.f32 %v1547, 1.0
      %v1552 = vadd.f32 %v1549, 1.0
      %v1553 = vrcp.pop %v1550
      %v1554 = vmul.f32 %v1550, %v1553
      %v1555 = vsub.f32 1.0, %v1554
      %v1556 = vmul.f32 %v1553, %v1555
      %v1557 = vadd.f32 %v1553, %v1556
      %vm1558 = vweird.f32 %v1550
      %vm1559 = vweird.f32 %v1553
      %vm1560 = vmor %vm1558, %vm1559
      %v1561 = vsel %vm1560, %v1553, %v1557
      %v1562 = vand.u32 2147483647, %v1550
      %vm1563 = vcmp.eq.f32.partialorder %v1562, 8.507059e+37
      %v1564 = vand.u32 %v1550, 2147483648
      %v1565 = vor.u32 1.1754944e-38, %v1564
      %v1566 = vsel %vm1563, %v1565, %v1561
      %v1567 = vmul.f32 1.0, %v1566
      %v1568 = vrcp.pop %v1551
      %v1569 = vmul.f32 %v1551, %v1568
      %v1570 = vsub.f32 1.0, %v1569
      %v1571 = vmul.f32 %v1568, %v1570
      %v1572 = vadd.f32 %v1568, %v1571
      %vm1573 = vweird.f32 %v1551
      %vm1574 = vweird.f32 %v1568
      %vm1575 = vmor %vm1573, %vm1574
      %v1576 = vsel %vm1575, %v1568, %v1572
      %v1577 = vand.u32 2147483647, %v1551
      %vm1578 = vcmp.eq.f32.partialorder %v1577, 8.507059e+37
      %v1579 = vand.u32 %v1551, 2147483648
      %v1580 = vor.u32 1.1754944e-38, %v1579
      %v1581 = vsel %vm1578, %v1580, %v1576
      %v1582 = vmul.f32 1.0, %v1581
      %v1583 = vrcp.pop %v1552
      %v1584 = vmul.f32 %v1552, %v1583
      %v1585 = vsub.f32 1.0, %v1584
      %v1586 = vmul.f32 %v1583, %v1585
      %v1587 = vadd.f32 %v1583, %v1586
      %vm1588 = vweird.f32 %v1552
      %vm1589 = vweird.f32 %v1583
      %vm1590 = vmor %vm1588, %vm1589
      %v1591 = vsel %vm1590, %v1583, %v1587
      %v1592 = vand.u32 2147483647, %v1552
      %vm1593 = vcmp.eq.f32.partialorder %v1592, 8.507059e+37
      %v1594 = vand.u32 %v1552, 2147483648
      %v1595 = vor.u32 1.1754944e-38, %v1594
      %v1596 = vsel %vm1593, %v1595, %v1591
      %v1597 = vmul.f32 1.0, %v1596
      %v1598 = vmul.f32 %v1530, %v1567
      %v1599 = vmul.f32 %v1532, %v1582
      %v1600 = vmul.f32 %v1535, %v1597
      %v1601 = vpack.c.bf16 %v1599, %v1598
      %v1602 = vpack.c.bf16 %v1600, %v1600
      %v1603 = vld [vmem:[%s636] sm:$0xf]
      %v1604 = vld [vmem:[%s636 + $0x4] sm:$0xf]
      %v1605 = vld [vmem:[%s636 + $0x8] sm:$0xf]
      %v1606 = vld [vmem:[%s636 + $0xc] sm:$0xf]
      %v1607 = vld [vmem:[%s636 + $0x10] sm:$0xf]
      %v1608 = vld [vmem:[%s636 + $0x14] sm:$0xf]
      %v1609 = vld [vmem:[%s636 + $0x18] sm:$0xf]
      %v1610 = vld [vmem:[%s636 + $0x1c] sm:$0xf]
      %v1611 = vld [vmem:[%s636 + $0x20] sm:$0xf]
      %v1612 = vld [vmem:[%s636 + $0x24] sm:$0xf]
      %v1613 = vld [vmem:[%s636 + $0x28] sm:$0xf]
      %v1614 = vld [vmem:[%s636 + $0x2c] sm:$0xf]
      %v1615 = vld [vmem:[%s636 + $0x30] sm:$0xf]
      %v1616 = vld [vmem:[%s636 + $0x34] sm:$0xf]
      %v1617 = vld [vmem:[%s636 + $0x38] sm:$0xf]
      %v1618 = vld [vmem:[%s636 + $0x3c] sm:$0xf]
      %v1619 = vld [vmem:[%s639] sm:$0x1]
      %v1621 = vperm.slane %v1619, 0
      %v1639 = vunpack.c.l.b16 %v1603
      %v1640 = vunpack.c.l.b16 %v1604
      %v1641 = vunpack.c.l.b16 %v1605
      %v1642 = vunpack.c.l.b16 %v1606
      %v1643 = vunpack.c.l.b16 %v1607
      %v1644 = vunpack.c.l.b16 %v1608
      %v1645 = vunpack.c.l.b16 %v1609
      %v1646 = vunpack.c.l.b16 %v1610
      %v1647 = vunpack.c.l.b16 %v1611
      %v1648 = vunpack.c.l.b16 %v1612
      %v1649 = vunpack.c.l.b16 %v1613
      %v1650 = vunpack.c.l.b16 %v1614
      %v1651 = vunpack.c.l.b16 %v1615
      %v1652 = vunpack.c.l.b16 %v1616
      %v1653 = vunpack.c.l.b16 %v1617
      %v1654 = vunpack.c.l.b16 %v1618
      %v1655 = vpack.c.b16 %v1640, %v1639
      %v1656 = vpack.c.b16 %v1642, %v1641
      %v1657 = vpack.c.b16 %v1644, %v1643
      %v1658 = vpack.c.b16 %v1646, %v1645
      %v1659 = vpack.c.b16 %v1648, %v1647
      %v1660 = vpack.c.b16 %v1650, %v1649
      %v1661 = vpack.c.b16 %v1652, %v1651
      %v1662 = vpack.c.b16 %v1654, %v1653
      %1671 = vmatpush.bf16.msra.mxu0 %v1662
      %1672 = vmatpush.bf16.msra.mxu0 %v1661
      %1673 = vmatpush.bf16.msra.mxu0 %v1660
      %1674 = vmatpush.bf16.msra.mxu0 %v1659
      %1675 = vmatpush.bf16.msra.mxu0 %v1658
      %1676 = vmatpush.bf16.msra.mxu0 %v1657
      %1677 = vmatpush.bf16.msra.mxu0 %v1656
      %1678 = vmatpush.bf16.msra.mxu0 %v1655
      %1679 = vmatmul.bf16.gmra.mxu0 %v1601
      %v1680 = vpop.f32.mrf.mxu0
      %v1681 = vadd.f32 %v1621, %v1680
      %v1682 = vpop.f32.mrf.mxu0
      %v1683 = vadd.f32 %v1621, %v1682
      %1684 = vmatmul.bf16.gmra.mxu0 %v1602
      %v1685 = vpop.f32.mrf.mxu0
      %v1686 = vadd.f32 %v1621, %v1685
      %v1687 = vpop.f32.mrf.mxu0
      %1688 = vdwg.mxu0
      %v1689 = vadd.f32 %v1409, %v1681
      %v1690 = vadd.f32 %v1410, %v1683
      %v1691 = vadd.f32 %v1411, %v1686
      %1692 = vst.msk [vmem:[%s644] sm:$0xff] %vm663, %v1689
      %1693 = vst.msk [vmem:[%s644 + $0x8] sm:$0xff] %vm663, %v1690
      %1694 = vst.msk [vmem:[%s644 + $0x10] sm:$0x1] %vm670, %v1691
      %p1695 = scmp.lt.s32.totalorder %s28, 1
      %s1696 = scalar_select %p1695, %s28, 1
      %s1697 = smul.addr %s1696, 3
      %s1698 = smul.addr %s1697, 8
      %s1699 = scalar_lea.vmem %s13, %s1698
      // Predicated region
      $region77: #{vision_transformer_forward.6} parent=71 // pred_check
        %p1700 = pneg %p392
      $region78: #{vision_transformer_forward.6} parent=71 // pred_check_branch
        %1702 = sbr.rel (%p1700) target = $region80
      $region79: #{vision_transformer_forward.6} parent=71 // pred_region
        _
      $region80: #{vision_transformer_forward.6} parent=71 // pred_fallthru
        _
    $region72: #{vision_transformer_forward.6} parent=5 // pred_fallthru
      _
    %p1703 = scmp.le.s32.totalorder 2, %s19
    // Predicated region
    $region81: #{vision_transformer_forward.6} parent=5 // pred_check
      %p1704 = pneg %p1703
    $region82: #{vision_transformer_forward.6} parent=5 // pred_check_branch
      %1706 = sbr.rel (%p1704) target = $region84
    $region83: #{vision_transformer_forward.6} parent=5 // pred_region
      %s1707 = ssub.s32 %s19, 2
      // Predicated region
      $region85: #{vision_transformer_forward.6} parent=83 // pred_check
        %p1708 = pneg %p398
      $region86: #{vision_transformer_forward.6} parent=83 // pred_check_branch
        %1710 = sbr.rel (%p1708) target = $region88
      $region87: #{vision_transformer_forward.6} parent=83 // pred_region
        %p1711 = scmp.lt.s32.totalorder %s30, 1
        %s1712 = scalar_select %p1711, %s30, 1
        %s1713 = smul.addr %s1712, 3
        %s1714 = smul.addr %s1713, 8
        %s1715 = scalar_lea.vmem %s13, %s1714
      $region88: #{vision_transformer_forward.6} parent=83 // pred_fallthru
        _
    $region84: #{vision_transformer_forward.6} parent=5 // pred_fallthru
      _
  $region6: #{vision_transformer_forward.6} parent=0 // loop_footer
    %s23 = sadd.s32 1, %s19
  $region7: #{vision_transformer_forward.6} parent=0 // loop_footer_branch
    %18 = sbr.rel target = $region3
  $region8: #{vision_transformer_forward.6} parent=0 // loop_exit
    _

</llo_original>
